<compile_context>
chip_gen: v5e
topology: v5e:2x2
jax: 0.10.0
libtpu: 0.0.40
codegen_flags: <defaults>
</compile_context>

<pallas_src>
import jax
import jax.numpy as jnp
from jax import lax
from jax.experimental import pallas as pl
from jax.experimental.pallas import tpu as pltpu

_LANE = 128
_SUBLANE = 8
# VMEM budget used when picking block_t (headroom under v7x's 64 MiB physical).
_BLOCK_VMEM_BUDGET = 40 * 2**20


# ----------------------------- small helpers --------------------------------

def _round_up(x, m):
    return ((x + m - 1) // m) * m


def _vmem_resident_spec():
    # Whole array placed once in VMEM, not grid-pipelined -> single copy
    # (review: stop double-buffering the resident weights).
    return pl.BlockSpec(memory_space=pltpu.MemorySpace.VMEM)


def _pick_time_block(T, Bp, d_in, Hp, x_itemsize, hseq_itemsize,
                     budget_bytes, target_rows=512):
    """Largest divisor of T whose per-block slabs fit budget_bytes; prefers the
    smallest such divisor that still gives >= target_rows matmul rows.
    NOTE: requires a divisor of T; prime T falls back to block_t=1 (correct but
    slow)."""
    fits = []
    for d in range(1, T + 1):
        if T % d:
            continue
        rows = d * Bp
        need = (2 * rows * d_in * x_itemsize        # x block (double-buffered)
                + 2 * rows * Hp * hseq_itemsize     # h_seq block (double-buffered)
                + rows * 4 * Hp * 4)                # xp scratch (f32)
        if need <= budget_bytes:
            fits.append(d)
    if not fits:
        return 1
    big = [d for d in fits if d * Bp >= target_rows]
    return min(big) if big else max(fits)


def _vmem_limit_bytes(need_bytes):
    # Explicit scoped-VMEM limit derived from slab sizes; clamp to 64 MiB so it
    # is <= physical VMEM on every generation (v7x = 64 MiB).
    return int(min(64 * 2**20, max(16 * 2**20, int(need_bytes * 1.5) + (2 << 20))))


# ----------------------------- Pallas kernels -------------------------------

def _lstm_gates(z, c, Hp):
    # Hp is a multiple of 128 -> all gate slices are lane-tile aligned.
    i_g = jax.nn.sigmoid(z[:, 0 * Hp:1 * Hp])
    f_g = jax.nn.sigmoid(z[:, 1 * Hp:2 * Hp])
    g_g = jnp.tanh(z[:, 2 * Hp:3 * Hp])
    o_g = jax.nn.sigmoid(z[:, 3 * Hp:4 * Hp])
    c_new = f_g * c + i_g * g_g
    h_new = o_g * jnp.tanh(c_new)
    return h_new, c_new


def _lstm_layer_seq_kernel(x_ref, wih_ref, whh_ref, b_ref,
                           hseq_ref,
                           xp_ref, h_sc, c_sc):
    """One LSTM layer over a time block. Emits h_seq (2-D, lane-dense) for the
    next layer.  Grid: (T // block_t,), sequential ("arbitrary")."""
    tb = pl.program_id(0)
    Bp, Hp = h_sc.shape
    rows = x_ref.shape[0]
    Tt = rows // Bp

    @pl.when(tb == 0)
    def _():
        h_sc[...] = jnp.zeros_like(h_sc)
        c_sc[...] = jnp.zeros_like(c_sc)

    # One big input-projection matmul for the whole time block (bias folded in),
    # written to VMEM scratch so the serial recurrence only keeps ONE timestep
    # live (bounds vreg pressure / avoids spills).
    xp_ref[...] = (jnp.dot(x_ref[...].astype(wih_ref.dtype), wih_ref[...],
                           preferred_element_type=jnp.float32)
                   + b_ref[...])

    whh = whh_ref[...]   # resident recurrent weights (single VMEM copy)

    def step(tt, carry):
        h, c = carry                                   # f32 (Bp, Hp)
        row = pl.multiple_of(tt * Bp, Bp)              # sublane-aligned start
        z = xp_ref[pl.ds(row, Bp), :] + jnp.dot(
            h.astype(whh.dtype), whh, preferred_element_type=jnp.float32)
        h_new, c_new = _lstm_gates(z, c, Hp)
        hseq_ref[pl.ds(row, Bp), :] = h_new.astype(hseq_ref.dtype)
        return h_new, c_new

    # Partial unroll: keeps LLO scheduler visibility without exploding vreg
    # pressure (each step is data-dependent on the previous h anyway).
    h_fin, c_fin = lax.fori_loop(0, Tt, step, (h_sc[...], c_sc[...]),
                                 unroll=min(8, Tt))
    h_sc[...] = h_fin
    c_sc[...] = c_fin


def _lstm_last_layer_kernel(x_ref, wih_ref, whh_ref, b_ref, lw_ref, lb_ref,
                            out_ref,
                            xp_ref, h_sc, c_sc):
    """Last LSTM layer with the final Linear fused into the last grid step.
    Emits only (Bp, O); the last layer's h_seq / h_fin never hit HBM."""
    tb = pl.program_id(0)
    Bp, Hp = h_sc.shape
    rows = x_ref.shape[0]
    Tt = rows // Bp

    @pl.when(tb == 0)
    def _():
        h_sc[...] = jnp.zeros_like(h_sc)
        c_sc[...] = jnp.zeros_like(c_sc)

    xp_ref[...] = (jnp.dot(x_ref[...].astype(wih_ref.dtype), wih_ref[...],
                           preferred_element_type=jnp.float32)
                   + b_ref[...])

    whh = whh_ref[...]

    def step(tt, carry):
        h, c = carry
        row = pl.multiple_of(tt * Bp, Bp)
        z = xp_ref[pl.ds(row, Bp), :] + jnp.dot(
            h.astype(whh.dtype), whh, preferred_element_type=jnp.float32)
        return _lstm_gates(z, c, Hp)

    h_fin, c_fin = lax.fori_loop(0, Tt, step, (h_sc[...], c_sc[...]),
                                 unroll=min(8, Tt))
    h_sc[...] = h_fin
    c_sc[...] = c_fin

    @pl.when(tb == pl.num_programs(0) - 1)
    def _():
        out_ref[...] = (jnp.dot(h_fin.astype(lw_ref.dtype), lw_ref[...],
                                preferred_element_type=jnp.float32)
                        + lb_ref[...]).astype(out_ref.dtype)


# ----------------------------- weight preparation ---------------------------

def _pad_gate_cols(w, H, Hp):
    """(K, 4H) -> (K, 4Hp): zero-pad each of the i,f,g,o gate blocks to Hp."""
    if Hp == H:
        return w
    K = w.shape[0]
    out = jnp.zeros((K, 4 * Hp), w.dtype)
    for g in range(4):
        out = out.at[:, g * Hp:g * Hp + H].set(w[:, g * H:(g + 1) * H])
    return out


def prepare_params(params, matmul_dtype=jnp.float32):
    """One-time weight prep (hoisted out of the forward path): transposes, bias
    sums, exact zero-padding of the hidden dim to a lane multiple, dtype casts.
    Use matmul_dtype=jnp.bfloat16 on v6e/v7x (relax test tolerance then)."""
    layers = []
    for li, layer in enumerate(params["lstm"]):
        H = layer["w_hh"].shape[1]
        Hp = _round_up(H, _LANE)
        wih_t = _pad_gate_cols(jnp.transpose(layer["w_ih"]), H, Hp)   # (D_in, 4Hp)
        whh_t = _pad_gate_cols(jnp.transpose(layer["w_hh"]), H, Hp)   # (H,   4Hp)
        bias = _pad_gate_cols((layer["b_ih"] + layer["b_hh"]).reshape(1, 4 * H),
                              H, Hp)                                  # (1,   4Hp)
        if Hp != H:
            whh_t = jnp.pad(whh_t, ((0, Hp - H), (0, 0)))             # (Hp, 4Hp)
            if li > 0:   # inter-layer inputs are the (padded) hidden vector
                wih_t = jnp.pad(wih_t, ((0, Hp - H), (0, 0)))         # (Hp, 4Hp)
        layers.append({
            "wih_t": wih_t.astype(matmul_dtype),
            "whh_t": whh_t.astype(matmul_dtype),
            "bias": bias.astype(jnp.float32),
        })
    H = params["lstm"][-1]["w_hh"].shape[1]
    Hp = _round_up(H, _LANE)
    lin_wT = jnp.transpose(params["lin_w"])                           # (H, O)
    if Hp != H:
        lin_wT = jnp.pad(lin_wT, ((0, Hp - H), (0, 0)))               # (Hp, O)
    return {
        "layers": layers,
        "lin_wT": lin_wT.astype(matmul_dtype),
        "lin_b": params["lin_b"].reshape(1, -1).astype(jnp.float32),
        "matmul_dtype": matmul_dtype,
    }


# ----------------------------- Python wrappers -------------------------------

def lstm_layer_pallas(x2d, layer_p, Bp, *, block_t=None):
    """Intermediate LSTM layer.  x2d: (T*Bp, D_in) time-major -> (T*Bp, Hp)."""
    rows_total, d_in = x2d.shape
    T = rows_total // Bp
    wih_t, whh_t, bias = layer_p["wih_t"], layer_p["whh_t"], layer_p["bias"]
    Hp = whh_t.shape[0]
    hseq_dtype = wih_t.dtype      # inter-layer activations in the matmul dtype

    w_bytes = (wih_t.size * wih_t.dtype.itemsize
               + whh_t.size * whh_t.dtype.itemsize + bias.size * 4)
    if block_t is None:
        block_t = _pick_time_block(
            T, Bp, d_in, Hp, x2d.dtype.itemsize, wih_t.dtype.itemsize,
            budget_bytes=max(_BLOCK_VMEM_BUDGET - w_bytes, 2 * 2**20))
    rows = block_t * Bp

    slab_bytes = (w_bytes
                  + 2 * rows * d_in * x2d.dtype.itemsize
                  + 2 * rows * Hp * wih_t.dtype.itemsize
                  + rows * 4 * Hp * 4
                  + 2 * Bp * Hp * 4)

    grid_spec = pltpu.PrefetchScalarGridSpec(
        num_scalar_prefetch=0,
        grid=(T // block_t,),
        in_specs=[
            pl.BlockSpec((rows, d_in), lambda tb: (tb, 0)),   # x time block
            _vmem_resident_spec(),                            # Wih_T
            _vmem_resident_spec(),                            # Whh_T
            _vmem_resident_spec(),                            # bias
        ],
        out_specs=pl.BlockSpec((rows, Hp), lambda tb: (tb, 0)),
        scratch_shapes=[
            pltpu.VMEM((rows, 4 * Hp), jnp.float32),   # xp (input projection)
            pltpu.VMEM((Bp, Hp), jnp.float32),         # h carry (f32)
            pltpu.VMEM((Bp, Hp), jnp.float32),         # c carry (f32)
        ],
    )

    return pl.pallas_call(
        _lstm_layer_seq_kernel,
        out_shape=jax.ShapeDtypeStruct((rows_total, Hp), hseq_dtype),
        grid_spec=grid_spec,
        compiler_params=pltpu.CompilerParams(
            dimension_semantics=("arbitrary",),   # time recurrence is sequential
            vmem_limit_bytes=_vmem_limit_bytes(slab_bytes)),
    )(x2d, wih_t, whh_t, bias)


def lstm_last_layer_pallas(x2d, layer_p, lin_wT, lin_b, Bp, *, block_t=None):
    """Last LSTM layer with fused Linear.  x2d: (T*Bp, D_in) -> (Bp, O)."""
    rows_total, d_in = x2d.shape
    T = rows_total // Bp
    wih_t, whh_t, bias = layer_p["wih_t"], layer_p["whh_t"], layer_p["bias"]
    Hp = whh_t.shape[0]
    O = lin_wT.shape[1]

    w_bytes = (wih_t.size * wih_t.dtype.itemsize
               + whh_t.size * whh_t.dtype.itemsize + bias.size * 4
               + lin_wT.size * lin_wT.dtype.itemsize + lin_b.size * 4)
    if block_t is None:
        block_t = _pick_time_block(
            T, Bp, d_in, Hp, x2d.dtype.itemsize, 0,
            budget_bytes=max(_BLOCK_VMEM_BUDGET - w_bytes, 2 * 2**20))
    rows = block_t * Bp

    slab_bytes = (w_bytes
                  + 2 * rows * d_in * x2d.dtype.itemsize
                  + rows * 4 * Hp * 4
                  + 2 * Bp * Hp * 4
                  + Bp * O * 4)

    grid_spec = pltpu.PrefetchScalarGridSpec(
        num_scalar_prefetch=0,
        grid=(T // block_t,),
        in_specs=[
            pl.BlockSpec((rows, d_in), lambda tb: (tb, 0)),
            _vmem_resident_spec(),     # Wih_T
            _vmem_resident_spec(),     # Whh_T
            _vmem_resident_spec(),     # bias
            _vmem_resident_spec(),     # lin_wT (read only on the final step)
            _vmem_resident_spec(),     # lin_b
        ],
        out_specs=pl.BlockSpec((Bp, O), lambda tb: (0, 0)),   # written last step
        scratch_shapes=[
            pltpu.VMEM((rows, 4 * Hp), jnp.float32),
            pltpu.VMEM((Bp, Hp), jnp.float32),
            pltpu.VMEM((Bp, Hp), jnp.float32),
        ],
    )

    return pl.pallas_call(
        _lstm_last_layer_kernel,
        out_shape=jax.ShapeDtypeStruct((Bp, O), jnp.float32),
        grid_spec=grid_spec,
        compiler_params=pltpu.CompilerParams(
            dimension_semantics=("arbitrary",),
            vmem_limit_bytes=_vmem_limit_bytes(slab_bytes)),
    )(x2d, wih_t, whh_t, bias, lin_wT, lin_b)


def lstm_model_forward(prepared, x_btd):
    """Mirrors LSTM.forward: x (B, T, D_in) batch_first -> (B, output_dim)."""
    B, T, D = x_btd.shape
    Bp = _round_up(max(B, _SUBLANE), _SUBLANE)     # sublane-aligned batch
    x = jnp.transpose(x_btd, (1, 0, 2))            # time-major for the kernels
    if Bp != B:
        x = jnp.pad(x, ((0, 0), (0, Bp - B), (0, 0)))
    # Lane/sublane-dense 2-D slab; cast to the matmul dtype once, HBM-side.
    h2d = x.reshape(T * Bp, D).astype(prepared["matmul_dtype"])

    layers = prepared["layers"]
    for layer_p in layers[:-1]:                    # intermediate layers -> h_seq
        h2d = lstm_layer_pallas(h2d, layer_p, Bp)
    out_p = lstm_last_layer_pallas(h2d, layers[-1],
                                   prepared["lin_wT"], prepared["lin_b"], Bp)
    return out_p[:B]                               # drop batch padding


# ----------------------------- reference (pure JAX) -------------------------

def lstm_model_reference(params, x_btd):
    B = x_btd.shape[0]
    h_in = x_btd
    for layer in params["lstm"]:
        H = layer["w_hh"].shape[1]
        wih_t = layer["w_ih"].T
        whh_t = layer["w_hh"].T
        bias = layer["b_ih"] + layer["b_hh"]
        h = jnp.zeros((B, H), jnp.float32)
        c = jnp.zeros((B, H), jnp.float32)
        outs = []
        for t in range(h_in.shape[1]):
            z = h_in[:, t, :] @ wih_t + h @ whh_t + bias
            i = jax.nn.sigmoid(z[:, 0 * H:1 * H])
            f = jax.nn.sigmoid(z[:, 1 * H:2 * H])
            g = jnp.tanh(z[:, 2 * H:3 * H])
            o = jax.nn.sigmoid(z[:, 3 * H:4 * H])
            c = f * c + i * g
            h = o * jnp.tanh(c)
            outs.append(h)
        h_in = jnp.stack(outs, axis=1)
        h_fin = h
    return h_fin @ params["lin_w"].T + params["lin_b"]


# ----------------------------- param init -----------------------------------

def init_params(key, input_dim, hidden_dim, num_layers, output_dim):
    params = {"lstm": []}
    bound = 1.0 / jnp.sqrt(hidden_dim)
    for l in range(num_layers):
        d_in = input_dim if l == 0 else hidden_dim
        key, k1, k2, k3, k4 = jax.random.split(key, 5)
        params["lstm"].append({
            "w_ih": jax.random.uniform(k1, (4 * hidden_dim, d_in),
                                       jnp.float32, -bound, bound),
            "w_hh": jax.random.uniform(k2, (4 * hidden_dim, hidden_dim),
                                       jnp.float32, -bound, bound),
            "b_ih": jax.random.uniform(k3, (4 * hidden_dim,),
                                       jnp.float32, -bound, bound),
            "b_hh": jax.random.uniform(k4, (4 * hidden_dim,),
                                       jnp.float32, -bound, bound),
        })
    key, k5, k6 = jax.random.split(key, 3)
    params["lin_w"] = jax.random.uniform(k5, (output_dim, hidden_dim),
                                         jnp.float32, -bound, bound)
    params["lin_b"] = jax.random.uniform(k6, (output_dim,),
                                         jnp.float32, -bound, bound)
    return params


# ----------------------------- main ------------------------------------------

if __name__ == "__main__":
    B, T = 2, 8
    input_dim, hidden_dim, num_layers, output_dim = 4, 32, 2, 4

    key = jax.random.PRNGKey(0)
    key, kx = jax.random.split(key)
    x = jax.random.normal(kx, (B, T, input_dim), jnp.float32)

    params = init_params(key, input_dim, hidden_dim, num_layers, output_dim)
    # One-time weight prep (transposes / bias sums / lane padding hoisted).
    # For production on v6e/v7x pass matmul_dtype=jnp.bfloat16 (carries stay f32).
    prepared = prepare_params(params, matmul_dtype=jnp.float32)

    out = lstm_model_forward(prepared, x)
    out = jax.block_until_ready(out)

    ref = lstm_model_reference(params, x)
    assert out.shape == (B, output_dim)
    assert jnp.allclose(out, ref, rtol=1e-5, atol=1e-5), "mismatch vs reference"

    print("KERNEL_OK")
</pallas_src>

<mosaic_0001>
module attributes {stable_mosaic.version = 11 : i64} {
  func.func @_lstm_layer_seq_kernel(%arg0: i32, %arg1: memref<64x4xf32, #tpu.memory_space<vmem>>, %arg2: memref<4x512xf32, #tpu.memory_space<vmem>>, %arg3: memref<128x512xf32, #tpu.memory_space<vmem>>, %arg4: memref<1x512xf32, #tpu.memory_space<vmem>>, %arg5: memref<64x128xf32, #tpu.memory_space<vmem>>, %arg6: memref<64x512xf32, #tpu.memory_space<vmem>>, %arg7: memref<8x128xf32, #tpu.memory_space<vmem>>, %arg8: memref<8x128xf32, #tpu.memory_space<vmem>>) attributes {dimension_semantics = [#tpu.dimension_semantics<arbitrary>], iteration_bounds = array<i64: 1>, scalar_prefetch = 0 : i64, scratch_operands = 3 : i64, tpu.core_type = #tpu.core_type<tc>, window_params = [{transform_indices = @transform_0, window_bounds = array<i64: 64, 4>}, {pipeline_mode = #tpu.pipeline_mode<synchronous>, transform_indices = @transform_1, window_bounds = array<i64: 4, 512>}, {pipeline_mode = #tpu.pipeline_mode<synchronous>, transform_indices = @transform_2, window_bounds = array<i64: 128, 512>}, {pipeline_mode = #tpu.pipeline_mode<synchronous>, transform_indices = @transform_3, window_bounds = array<i64: 1, 512>}, {transform_indices = @transform_4, window_bounds = array<i64: 64, 128>}]} {
    %c0_i32 = arith.constant 0 : i32
    %0 = arith.cmpi eq, %arg0, %c0_i32 : i32
    %1 = arith.extui %0 : i1 to i32
    %c0_i32_0 = arith.constant 0 : i32
    %2 = arith.cmpi ne, %1, %c0_i32_0 : i32
    scf.if %2 {
      %cst_75 = arith.constant 0.000000e+00 : f32
      %279 = vector.broadcast %cst_75 : f32 to vector<8x128xf32>
      %c0_76 = arith.constant 0 : index
      %c0_77 = arith.constant 0 : index
      %280 = vector.load %arg7[%c0_76, %c0_77] : memref<8x128xf32, #tpu.memory_space<vmem>>, vector<8x128xf32>
      tpu.vector_store %arg7[%c0_76, %c0_77], %279 {strides = array<i32>} : memref<8x128xf32, #tpu.memory_space<vmem>>, vector<8x128xf32>,
      %cst_78 = arith.constant 0.000000e+00 : f32
      %281 = vector.broadcast %cst_78 : f32 to vector<8x128xf32>
      %c0_79 = arith.constant 0 : index
      %c0_80 = arith.constant 0 : index
      %282 = vector.load %arg8[%c0_79, %c0_80] : memref<8x128xf32, #tpu.memory_space<vmem>>, vector<8x128xf32>
      tpu.vector_store %arg8[%c0_79, %c0_80], %281 {strides = array<i32>} : memref<8x128xf32, #tpu.memory_space<vmem>>, vector<8x128xf32>,
    } else {
    }
    %c0 = arith.constant 0 : index
    %c0_1 = arith.constant 0 : index
    %3 = vector.load %arg1[%c0, %c0_1] : memref<64x4xf32, #tpu.memory_space<vmem>>, vector<64x4xf32>
    %c0_2 = arith.constant 0 : index
    %c0_3 = arith.constant 0 : index
    %4 = vector.load %arg2[%c0_2, %c0_3] : memref<4x512xf32, #tpu.memory_space<vmem>>, vector<4x512xf32>
    %cst = arith.constant dense<0.000000e+00> : vector<64x512xf32>
    %5 = tpu.matmul %3, %4, %cst {dimension_numbers = #tpu.dot_dimension_numbers<[1], [0], [0], [1], [0, 0, 1, 1], [], []>} : vector<64x4xf32>, vector<4x512xf32>, vector<64x512xf32> -> vector<64x512xf32>
    %c0_4 = arith.constant 0 : index
    %c0_5 = arith.constant 0 : index
    %6 = vector.load %arg4[%c0_4, %c0_5] : memref<1x512xf32, #tpu.memory_space<vmem>>, vector<1x512xf32>
    %7 = vector.broadcast %6 : vector<1x512xf32> to vector<64x512xf32>
    %8 = arith.addf %5, %7 : vector<64x512xf32>
    %c0_6 = arith.constant 0 : index
    %c0_7 = arith.constant 0 : index
    %9 = vector.load %arg6[%c0_6, %c0_7] : memref<64x512xf32, #tpu.memory_space<vmem>>, vector<64x512xf32>
    tpu.vector_store %arg6[%c0_6, %c0_7], %8 {strides = array<i32>} : memref<64x512xf32, #tpu.memory_space<vmem>>, vector<64x512xf32>,
    %c0_8 = arith.constant 0 : index
    %c0_9 = arith.constant 0 : index
    %10 = vector.load %arg3[%c0_8, %c0_9] : memref<128x512xf32, #tpu.memory_space<vmem>>, vector<128x512xf32>
    %c0_10 = arith.constant 0 : index
    %c0_11 = arith.constant 0 : index
    %11 = vector.load %arg7[%c0_10, %c0_11] : memref<8x128xf32, #tpu.memory_space<vmem>>, vector<8x128xf32>
    %c0_12 = arith.constant 0 : index
    %c0_13 = arith.constant 0 : index
    %12 = vector.load %arg8[%c0_12, %c0_13] : memref<8x128xf32, #tpu.memory_space<vmem>>, vector<8x128xf32>
    %c0_i32_14 = arith.constant 0 : i32
    %c8_i32 = arith.constant 8 : i32
    %13 = arith.muli %c0_i32_14, %c8_i32 : i32
    %14 = tpu.assume_multiple %13, 8 : i32
    %15 = arith.index_cast %14 : i32 to index
    %c0_15 = arith.constant 0 : index
    %16 = vector.load %arg6[%15, %c0_15] : memref<64x512xf32, #tpu.memory_space<vmem>>, vector<8x512xf32>
    %cst_16 = arith.constant dense<0.000000e+00> : vector<8x512xf32>
    %17 = tpu.matmul %11, %10, %cst_16 {dimension_numbers = #tpu.dot_dimension_numbers<[1], [0], [0], [1], [0, 0, 1, 1], [], []>} : vector<8x128xf32>, vector<128x512xf32>, vector<8x512xf32> -> vector<8x512xf32>
    %18 = arith.addf %16, %17 : vector<8x512xf32>
    %19 = vector.extract_strided_slice %18 {offsets = [0, 0], sizes = [8, 128], strides = [1, 1]} : vector<8x512xf32> to vector<8x128xf32>
    %20 = arith.negf %19 : vector<8x128xf32>
    %21 = math.exp %20 : vector<8x128xf32>
    %cst_17 = arith.constant 1.000000e+00 : f32
    %22 = vector.broadcast %cst_17 : f32 to vector<8x128xf32>
    %23 = arith.addf %22, %21 : vector<8x128xf32>
    %24 = arith.divf %22, %23 : vector<8x128xf32>
    %25 = vector.extract_strided_slice %18 {offsets = [0, 128], sizes = [8, 128], strides = [1, 1]} : vector<8x512xf32> to vector<8x128xf32>
    %26 = arith.negf %25 : vector<8x128xf32>
    %27 = math.exp %26 : vector<8x128xf32>
    %cst_18 = arith.constant 1.000000e+00 : f32
    %28 = vector.broadcast %cst_18 : f32 to vector<8x128xf32>
    %29 = arith.addf %28, %27 : vector<8x128xf32>
    %30 = arith.divf %28, %29 : vector<8x128xf32>
    %31 = vector.extract_strided_slice %18 {offsets = [0, 256], sizes = [8, 128], strides = [1, 1]} : vector<8x512xf32> to vector<8x128xf32>
    %32 = math.tanh %31 : vector<8x128xf32>
    %33 = vector.extract_strided_slice %18 {offsets = [0, 384], sizes = [8, 128], strides = [1, 1]} : vector<8x512xf32> to vector<8x128xf32>
    %34 = arith.negf %33 : vector<8x128xf32>
    %35 = math.exp %34 : vector<8x128xf32>
    %cst_19 = arith.constant 1.000000e+00 : f32
    %36 = vector.broadcast %cst_19 : f32 to vector<8x128xf32>
    %37 = arith.addf %36, %35 : vector<8x128xf32>
    %38 = arith.divf %36, %37 : vector<8x128xf32>
    %39 = arith.mulf %30, %12 : vector<8x128xf32>
    %40 = arith.mulf %24, %32 : vector<8x128xf32>
    %41 = arith.addf %39, %40 : vector<8x128xf32>
    %42 = math.tanh %41 : vector<8x128xf32>
    %43 = arith.mulf %38, %42 : vector<8x128xf32>
    %44 = arith.index_cast %14 : i32 to index
    %c0_20 = arith.constant 0 : index
    %45 = vector.load %arg5[%44, %c0_20] : memref<64x128xf32, #tpu.memory_space<vmem>>, vector<8x128xf32>
    tpu.vector_store %arg5[%44, %c0_20], %43 {strides = array<i32>} : memref<64x128xf32, #tpu.memory_space<vmem>>, vector<8x128xf32>,
    %c1_i32 = arith.constant 1 : i32
    %c8_i32_21 = arith.constant 8 : i32
    %46 = arith.muli %c1_i32, %c8_i32_21 : i32
    %47 = tpu.assume_multiple %46, 8 : i32
    %48 = arith.index_cast %47 : i32 to index
    %c0_22 = arith.constant 0 : index
    %49 = vector.load %arg6[%48, %c0_22] : memref<64x512xf32, #tpu.memory_space<vmem>>, vector<8x512xf32>
    %cst_23 = arith.constant dense<0.000000e+00> : vector<8x512xf32>
    %50 = tpu.matmul %43, %10, %cst_23 {dimension_numbers = #tpu.dot_dimension_numbers<[1], [0], [0], [1], [0, 0, 1, 1], [], []>} : vector<8x128xf32>, vector<128x512xf32>, vector<8x512xf32> -> vector<8x512xf32>
    %51 = arith.addf %49, %50 : vector<8x512xf32>
    %52 = vector.extract_strided_slice %51 {offsets = [0, 0], sizes = [8, 128], strides = [1, 1]} : vector<8x512xf32> to vector<8x128xf32>
    %53 = arith.negf %52 : vector<8x128xf32>
    %54 = math.exp %53 : vector<8x128xf32>
    %cst_24 = arith.constant 1.000000e+00 : f32
    %55 = vector.broadcast %cst_24 : f32 to vector<8x128xf32>
    %56 = arith.addf %55, %54 : vector<8x128xf32>
    %57 = arith.divf %55, %56 : vector<8x128xf32>
    %58 = vector.extract_strided_slice %51 {offsets = [0, 128], sizes = [8, 128], strides = [1, 1]} : vector<8x512xf32> to vector<8x128xf32>
    %59 = arith.negf %58 : vector<8x128xf32>
    %60 = math.exp %59 : vector<8x128xf32>
    %cst_25 = arith.constant 1.000000e+00 : f32
    %61 = vector.broadcast %cst_25 : f32 to vector<8x128xf32>
    %62 = arith.addf %61, %60 : vector<8x128xf32>
    %63 = arith.divf %61, %62 : vector<8x128xf32>
    %64 = vector.extract_strided_slice %51 {offsets = [0, 256], sizes = [8, 128], strides = [1, 1]} : vector<8x512xf32> to vector<8x128xf32>
    %65 = math.tanh %64 : vector<8x128xf32>
    %66 = vector.extract_strided_slice %51 {offsets = [0, 384], sizes = [8, 128], strides = [1, 1]} : vector<8x512xf32> to vector<8x128xf32>
    %67 = arith.negf %66 : vector<8x128xf32>
    %68 = math.exp %67 : vector<8x128xf32>
    %cst_26 = arith.constant 1.000000e+00 : f32
    %69 = vector.broadcast %cst_26 : f32 to vector<8x128xf32>
    %70 = arith.addf %69, %68 : vector<8x128xf32>
    %71 = arith.divf %69, %70 : vector<8x128xf32>
    %72 = arith.mulf %63, %41 : vector<8x128xf32>
    %73 = arith.mulf %57, %65 : vector<8x128xf32>
    %74 = arith.addf %72, %73 : vector<8x128xf32>
    %75 = math.tanh %74 : vector<8x128xf32>
    %76 = arith.mulf %71, %75 : vector<8x128xf32>
    %77 = arith.index_cast %47 : i32 to index
    %c0_27 = arith.constant 0 : index
    %78 = vector.load %arg5[%77, %c0_27] : memref<64x128xf32, #tpu.memory_space<vmem>>, vector<8x128xf32>
    tpu.vector_store %arg5[%77, %c0_27], %76 {strides = array<i32>} : memref<64x128xf32, #tpu.memory_space<vmem>>, vector<8x128xf32>,
    %c2_i32 = arith.constant 2 : i32
    %c8_i32_28 = arith.constant 8 : i32
    %79 = arith.muli %c2_i32, %c8_i32_28 : i32
    %80 = tpu.assume_multiple %79, 8 : i32
    %81 = arith.index_cast %80 : i32 to index
    %c0_29 = arith.constant 0 : index
    %82 = vector.load %arg6[%81, %c0_29] : memref<64x512xf32, #tpu.memory_space<vmem>>, vector<8x512xf32>
    %cst_30 = arith.constant dense<0.000000e+00> : vector<8x512xf32>
    %83 = tpu.matmul %76, %10, %cst_30 {dimension_numbers = #tpu.dot_dimension_numbers<[1], [0], [0], [1], [0, 0, 1, 1], [], []>} : vector<8x128xf32>, vector<128x512xf32>, vector<8x512xf32> -> vector<8x512xf32>
    %84 = arith.addf %82, %83 : vector<8x512xf32>
    %85 = vector.extract_strided_slice %84 {offsets = [0, 0], sizes = [8, 128], strides = [1, 1]} : vector<8x512xf32> to vector<8x128xf32>
    %86 = arith.negf %85 : vector<8x128xf32>
    %87 = math.exp %86 : vector<8x128xf32>
    %cst_31 = arith.constant 1.000000e+00 : f32
    %88 = vector.broadcast %cst_31 : f32 to vector<8x128xf32>
    %89 = arith.addf %88, %87 : vector<8x128xf32>
    %90 = arith.divf %88, %89 : vector<8x128xf32>
    %91 = vector.extract_strided_slice %84 {offsets = [0, 128], sizes = [8, 128], strides = [1, 1]} : vector<8x512xf32> to vector<8x128xf32>
    %92 = arith.negf %91 : vector<8x128xf32>
    %93 = math.exp %92 : vector<8x128xf32>
    %cst_32 = arith.constant 1.000000e+00 : f32
    %94 = vector.broadcast %cst_32 : f32 to vector<8x128xf32>
    %95 = arith.addf %94, %93 : vector<8x128xf32>
    %96 = arith.divf %94, %95 : vector<8x128xf32>
    %97 = vector.extract_strided_slice %84 {offsets = [0, 256], sizes = [8, 128], strides = [1, 1]} : vector<8x512xf32> to vector<8x128xf32>
    %98 = math.tanh %97 : vector<8x128xf32>
    %99 = vector.extract_strided_slice %84 {offsets = [0, 384], sizes = [8, 128], strides = [1, 1]} : vector<8x512xf32> to vector<8x128xf32>
    %100 = arith.negf %99 : vector<8x128xf32>
    %101 = math.exp %100 : vector<8x128xf32>
    %cst_33 = arith.constant 1.000000e+00 : f32
    %102 = vector.broadcast %cst_33 : f32 to vector<8x128xf32>
    %103 = arith.addf %102, %101 : vector<8x128xf32>
    %104 = arith.divf %102, %103 : vector<8x128xf32>
    %105 = arith.mulf %96, %74 : vector<8x128xf32>
    %106 = arith.mulf %90, %98 : vector<8x128xf32>
    %107 = arith.addf %105, %106 : vector<8x128xf32>
    %108 = math.tanh %107 : vector<8x128xf32>
    %109 = arith.mulf %104, %108 : vector<8x128xf32>
    %110 = arith.index_cast %80 : i32 to index
    %c0_34 = arith.constant 0 : index
    %111 = vector.load %arg5[%110, %c0_34] : memref<64x128xf32, #tpu.memory_space<vmem>>, vector<8x128xf32>
    tpu.vector_store %arg5[%110, %c0_34], %109 {strides = array<i32>} : memref<64x128xf32, #tpu.memory_space<vmem>>, vector<8x128xf32>,
    %c3_i32 = arith.constant 3 : i32
    %c8_i32_35 = arith.constant 8 : i32
    %112 = arith.muli %c3_i32, %c8_i32_35 : i32
    %113 = tpu.assume_multiple %112, 8 : i32
    %114 = arith.index_cast %113 : i32 to index
    %c0_36 = arith.constant 0 : index
    %115 = vector.load %arg6[%114, %c0_36] : memref<64x512xf32, #tpu.memory_space<vmem>>, vector<8x512xf32>
    %cst_37 = arith.constant dense<0.000000e+00> : vector<8x512xf32>
    %116 = tpu.matmul %109, %10, %cst_37 {dimension_numbers = #tpu.dot_dimension_numbers<[1], [0], [0], [1], [0, 0, 1, 1], [], []>} : vector<8x128xf32>, vector<128x512xf32>, vector<8x512xf32> -> vector<8x512xf32>
    %117 = arith.addf %115, %116 : vector<8x512xf32>
    %118 = vector.extract_strided_slice %117 {offsets = [0, 0], sizes = [8, 128], strides = [1, 1]} : vector<8x512xf32> to vector<8x128xf32>
    %119 = arith.negf %118 : vector<8x128xf32>
    %120 = math.exp %119 : vector<8x128xf32>
    %cst_38 = arith.constant 1.000000e+00 : f32
    %121 = vector.broadcast %cst_38 : f32 to vector<8x128xf32>
    %122 = arith.addf %121, %120 : vector<8x128xf32>
    %123 = arith.divf %121, %122 : vector<8x128xf32>
    %124 = vector.extract_strided_slice %117 {offsets = [0, 128], sizes = [8, 128], strides = [1, 1]} : vector<8x512xf32> to vector<8x128xf32>
    %125 = arith.negf %124 : vector<8x128xf32>
    %126 = math.exp %125 : vector<8x128xf32>
    %cst_39 = arith.constant 1.000000e+00 : f32
    %127 = vector.broadcast %cst_39 : f32 to vector<8x128xf32>
    %128 = arith.addf %127, %126 : vector<8x128xf32>
    %129 = arith.divf %127, %128 : vector<8x128xf32>
    %130 = vector.extract_strided_slice %117 {offsets = [0, 256], sizes = [8, 128], strides = [1, 1]} : vector<8x512xf32> to vector<8x128xf32>
    %131 = math.tanh %130 : vector<8x128xf32>
    %132 = vector.extract_strided_slice %117 {offsets = [0, 384], sizes = [8, 128], strides = [1, 1]} : vector<8x512xf32> to vector<8x128xf32>
    %133 = arith.negf %132 : vector<8x128xf32>
    %134 = math.exp %133 : vector<8x128xf32>
    %cst_40 = arith.constant 1.000000e+00 : f32
    %135 = vector.broadcast %cst_40 : f32 to vector<8x128xf32>
    %136 = arith.addf %135, %134 : vector<8x128xf32>
    %137 = arith.divf %135, %136 : vector<8x128xf32>
    %138 = arith.mulf %129, %107 : vector<8x128xf32>
    %139 = arith.mulf %123, %131 : vector<8x128xf32>
    %140 = arith.addf %138, %139 : vector<8x128xf32>
    %141 = math.tanh %140 : vector<8x128xf32>
    %142 = arith.mulf %137, %141 : vector<8x128xf32>
    %143 = arith.index_cast %113 : i32 to index
    %c0_41 = arith.constant 0 : index
    %144 = vector.load %arg5[%143, %c0_41] : memref<64x128xf32, #tpu.memory_space<vmem>>, vector<8x128xf32>
    tpu.vector_store %arg5[%143, %c0_41], %142 {strides = array<i32>} : memref<64x128xf32, #tpu.memory_space<vmem>>, vector<8x128xf32>,
    %c4_i32 = arith.constant 4 : i32
    %c8_i32_42 = arith.constant 8 : i32
    %145 = arith.muli %c4_i32, %c8_i32_42 : i32
    %146 = tpu.assume_multiple %145, 8 : i32
    %147 = arith.index_cast %146 : i32 to index
    %c0_43 = arith.constant 0 : index
    %148 = vector.load %arg6[%147, %c0_43] : memref<64x512xf32, #tpu.memory_space<vmem>>, vector<8x512xf32>
    %cst_44 = arith.constant dense<0.000000e+00> : vector<8x512xf32>
    %149 = tpu.matmul %142, %10, %cst_44 {dimension_numbers = #tpu.dot_dimension_numbers<[1], [0], [0], [1], [0, 0, 1, 1], [], []>} : vector<8x128xf32>, vector<128x512xf32>, vector<8x512xf32> -> vector<8x512xf32>
    %150 = arith.addf %148, %149 : vector<8x512xf32>
    %151 = vector.extract_strided_slice %150 {offsets = [0, 0], sizes = [8, 128], strides = [1, 1]} : vector<8x512xf32> to vector<8x128xf32>
    %152 = arith.negf %151 : vector<8x128xf32>
    %153 = math.exp %152 : vector<8x128xf32>
    %cst_45 = arith.constant 1.000000e+00 : f32
    %154 = vector.broadcast %cst_45 : f32 to vector<8x128xf32>
    %155 = arith.addf %154, %153 : vector<8x128xf32>
    %156 = arith.divf %154, %155 : vector<8x128xf32>
    %157 = vector.extract_strided_slice %150 {offsets = [0, 128], sizes = [8, 128], strides = [1, 1]} : vector<8x512xf32> to vector<8x128xf32>
    %158 = arith.negf %157 : vector<8x128xf32>
    %159 = math.exp %158 : vector<8x128xf32>
    %cst_46 = arith.constant 1.000000e+00 : f32
    %160 = vector.broadcast %cst_46 : f32 to vector<8x128xf32>
    %161 = arith.addf %160, %159 : vector<8x128xf32>
    %162 = arith.divf %160, %161 : vector<8x128xf32>
    %163 = vector.extract_strided_slice %150 {offsets = [0, 256], sizes = [8, 128], strides = [1, 1]} : vector<8x512xf32> to vector<8x128xf32>
    %164 = math.tanh %163 : vector<8x128xf32>
    %165 = vector.extract_strided_slice %150 {offsets = [0, 384], sizes = [8, 128], strides = [1, 1]} : vector<8x512xf32> to vector<8x128xf32>
    %166 = arith.negf %165 : vector<8x128xf32>
    %167 = math.exp %166 : vector<8x128xf32>
    %cst_47 = arith.constant 1.000000e+00 : f32
    %168 = vector.broadcast %cst_47 : f32 to vector<8x128xf32>
    %169 = arith.addf %168, %167 : vector<8x128xf32>
    %170 = arith.divf %168, %169 : vector<8x128xf32>
    %171 = arith.mulf %162, %140 : vector<8x128xf32>
    %172 = arith.mulf %156, %164 : vector<8x128xf32>
    %173 = arith.addf %171, %172 : vector<8x128xf32>
    %174 = math.tanh %173 : vector<8x128xf32>
    %175 = arith.mulf %170, %174 : vector<8x128xf32>
    %176 = arith.index_cast %146 : i32 to index
    %c0_48 = arith.constant 0 : index
    %177 = vector.load %arg5[%176, %c0_48] : memref<64x128xf32, #tpu.memory_space<vmem>>, vector<8x128xf32>
    tpu.vector_store %arg5[%176, %c0_48], %175 {strides = array<i32>} : memref<64x128xf32, #tpu.memory_space<vmem>>, vector<8x128xf32>,
    %c5_i32 = arith.constant 5 : i32
    %c8_i32_49 = arith.constant 8 : i32
    %178 = arith.muli %c5_i32, %c8_i32_49 : i32
    %179 = tpu.assume_multiple %178, 8 : i32
    %180 = arith.index_cast %179 : i32 to index
    %c0_50 = arith.constant 0 : index
    %181 = vector.load %arg6[%180, %c0_50] : memref<64x512xf32, #tpu.memory_space<vmem>>, vector<8x512xf32>
    %cst_51 = arith.constant dense<0.000000e+00> : vector<8x512xf32>
    %182 = tpu.matmul %175, %10, %cst_51 {dimension_numbers = #tpu.dot_dimension_numbers<[1], [0], [0], [1], [0, 0, 1, 1], [], []>} : vector<8x128xf32>, vector<128x512xf32>, vector<8x512xf32> -> vector<8x512xf32>
    %183 = arith.addf %181, %182 : vector<8x512xf32>
    %184 = vector.extract_strided_slice %183 {offsets = [0, 0], sizes = [8, 128], strides = [1, 1]} : vector<8x512xf32> to vector<8x128xf32>
    %185 = arith.negf %184 : vector<8x128xf32>
    %186 = math.exp %185 : vector<8x128xf32>
    %cst_52 = arith.constant 1.000000e+00 : f32
    %187 = vector.broadcast %cst_52 : f32 to vector<8x128xf32>
    %188 = arith.addf %187, %186 : vector<8x128xf32>
    %189 = arith.divf %187, %188 : vector<8x128xf32>
    %190 = vector.extract_strided_slice %183 {offsets = [0, 128], sizes = [8, 128], strides = [1, 1]} : vector<8x512xf32> to vector<8x128xf32>
    %191 = arith.negf %190 : vector<8x128xf32>
    %192 = math.exp %191 : vector<8x128xf32>
    %cst_53 = arith.constant 1.000000e+00 : f32
    %193 = vector.broadcast %cst_53 : f32 to vector<8x128xf32>
    %194 = arith.addf %193, %192 : vector<8x128xf32>
    %195 = arith.divf %193, %194 : vector<8x128xf32>
    %196 = vector.extract_strided_slice %183 {offsets = [0, 256], sizes = [8, 128], strides = [1, 1]} : vector<8x512xf32> to vector<8x128xf32>
    %197 = math.tanh %196 : vector<8x128xf32>
    %198 = vector.extract_strided_slice %183 {offsets = [0, 384], sizes = [8, 128], strides = [1, 1]} : vector<8x512xf32> to vector<8x128xf32>
    %199 = arith.negf %198 : vector<8x128xf32>
    %200 = math.exp %199 : vector<8x128xf32>
    %cst_54 = arith.constant 1.000000e+00 : f32
    %201 = vector.broadcast %cst_54 : f32 to vector<8x128xf32>
    %202 = arith.addf %201, %200 : vector<8x128xf32>
    %203 = arith.divf %201, %202 : vector<8x128xf32>
    %204 = arith.mulf %195, %173 : vector<8x128xf32>
    %205 = arith.mulf %189, %197 : vector<8x128xf32>
    %206 = arith.addf %204, %205 : vector<8x128xf32>
    %207 = math.tanh %206 : vector<8x128xf32>
    %208 = arith.mulf %203, %207 : vector<8x128xf32>
    %209 = arith.index_cast %179 : i32 to index
    %c0_55 = arith.constant 0 : index
    %210 = vector.load %arg5[%209, %c0_55] : memref<64x128xf32, #tpu.memory_space<vmem>>, vector<8x128xf32>
    tpu.vector_store %arg5[%209, %c0_55], %208 {strides = array<i32>} : memref<64x128xf32, #tpu.memory_space<vmem>>, vector<8x128xf32>,
    %c6_i32 = arith.constant 6 : i32
    %c8_i32_56 = arith.constant 8 : i32
    %211 = arith.muli %c6_i32, %c8_i32_56 : i32
    %212 = tpu.assume_multiple %211, 8 : i32
    %213 = arith.index_cast %212 : i32 to index
    %c0_57 = arith.constant 0 : index
    %214 = vector.load %arg6[%213, %c0_57] : memref<64x512xf32, #tpu.memory_space<vmem>>, vector<8x512xf32>
    %cst_58 = arith.constant dense<0.000000e+00> : vector<8x512xf32>
    %215 = tpu.matmul %208, %10, %cst_58 {dimension_numbers = #tpu.dot_dimension_numbers<[1], [0], [0], [1], [0, 0, 1, 1], [], []>} : vector<8x128xf32>, vector<128x512xf32>, vector<8x512xf32> -> vector<8x512xf32>
    %216 = arith.addf %214, %215 : vector<8x512xf32>
    %217 = vector.extract_strided_slice %216 {offsets = [0, 0], sizes = [8, 128], strides = [1, 1]} : vector<8x512xf32> to vector<8x128xf32>
    %218 = arith.negf %217 : vector<8x128xf32>
    %219 = math.exp %218 : vector<8x128xf32>
    %cst_59 = arith.constant 1.000000e+00 : f32
    %220 = vector.broadcast %cst_59 : f32 to vector<8x128xf32>
    %221 = arith.addf %220, %219 : vector<8x128xf32>
    %222 = arith.divf %220, %221 : vector<8x128xf32>
    %223 = vector.extract_strided_slice %216 {offsets = [0, 128], sizes = [8, 128], strides = [1, 1]} : vector<8x512xf32> to vector<8x128xf32>
    %224 = arith.negf %223 : vector<8x128xf32>
    %225 = math.exp %224 : vector<8x128xf32>
    %cst_60 = arith.constant 1.000000e+00 : f32
    %226 = vector.broadcast %cst_60 : f32 to vector<8x128xf32>
    %227 = arith.addf %226, %225 : vector<8x128xf32>
    %228 = arith.divf %226, %227 : vector<8x128xf32>
    %229 = vector.extract_strided_slice %216 {offsets = [0, 256], sizes = [8, 128], strides = [1, 1]} : vector<8x512xf32> to vector<8x128xf32>
    %230 = math.tanh %229 : vector<8x128xf32>
    %231 = vector.extract_strided_slice %216 {offsets = [0, 384], sizes = [8, 128], strides = [1, 1]} : vector<8x512xf32> to vector<8x128xf32>
    %232 = arith.negf %231 : vector<8x128xf32>
    %233 = math.exp %232 : vector<8x128xf32>
    %cst_61 = arith.constant 1.000000e+00 : f32
    %234 = vector.broadcast %cst_61 : f32 to vector<8x128xf32>
    %235 = arith.addf %234, %233 : vector<8x128xf32>
    %236 = arith.divf %234, %235 : vector<8x128xf32>
    %237 = arith.mulf %228, %206 : vector<8x128xf32>
    %238 = arith.mulf %222, %230 : vector<8x128xf32>
    %239 = arith.addf %237, %238 : vector<8x128xf32>
    %240 = math.tanh %239 : vector<8x128xf32>
    %241 = arith.mulf %236, %240 : vector<8x128xf32>
    %242 = arith.index_cast %212 : i32 to index
    %c0_62 = arith.constant 0 : index
    %243 = vector.load %arg5[%242, %c0_62] : memref<64x128xf32, #tpu.memory_space<vmem>>, vector<8x128xf32>
    tpu.vector_store %arg5[%242, %c0_62], %241 {strides = array<i32>} : memref<64x128xf32, #tpu.memory_space<vmem>>, vector<8x128xf32>,
    %c7_i32 = arith.constant 7 : i32
    %c8_i32_63 = arith.constant 8 : i32
    %244 = arith.muli %c7_i32, %c8_i32_63 : i32
    %245 = tpu.assume_multiple %244, 8 : i32
    %246 = arith.index_cast %245 : i32 to index
    %c0_64 = arith.constant 0 : index
    %247 = vector.load %arg6[%246, %c0_64] : memref<64x512xf32, #tpu.memory_space<vmem>>, vector<8x512xf32>
    %cst_65 = arith.constant dense<0.000000e+00> : vector<8x512xf32>
    %248 = tpu.matmul %241, %10, %cst_65 {dimension_numbers = #tpu.dot_dimension_numbers<[1], [0], [0], [1], [0, 0, 1, 1], [], []>} : vector<8x128xf32>, vector<128x512xf32>, vector<8x512xf32> -> vector<8x512xf32>
    %249 = arith.addf %247, %248 : vector<8x512xf32>
    %250 = vector.extract_strided_slice %249 {offsets = [0, 0], sizes = [8, 128], strides = [1, 1]} : vector<8x512xf32> to vector<8x128xf32>
    %251 = arith.negf %250 : vector<8x128xf32>
    %252 = math.exp %251 : vector<8x128xf32>
    %cst_66 = arith.constant 1.000000e+00 : f32
    %253 = vector.broadcast %cst_66 : f32 to vector<8x128xf32>
    %254 = arith.addf %253, %252 : vector<8x128xf32>
    %255 = arith.divf %253, %254 : vector<8x128xf32>
    %256 = vector.extract_strided_slice %249 {offsets = [0, 128], sizes = [8, 128], strides = [1, 1]} : vector<8x512xf32> to vector<8x128xf32>
    %257 = arith.negf %256 : vector<8x128xf32>
    %258 = math.exp %257 : vector<8x128xf32>
    %cst_67 = arith.constant 1.000000e+00 : f32
    %259 = vector.broadcast %cst_67 : f32 to vector<8x128xf32>
    %260 = arith.addf %259, %258 : vector<8x128xf32>
    %261 = arith.divf %259, %260 : vector<8x128xf32>
    %262 = vector.extract_strided_slice %249 {offsets = [0, 256], sizes = [8, 128], strides = [1, 1]} : vector<8x512xf32> to vector<8x128xf32>
    %263 = math.tanh %262 : vector<8x128xf32>
    %264 = vector.extract_strided_slice %249 {offsets = [0, 384], sizes = [8, 128], strides = [1, 1]} : vector<8x512xf32> to vector<8x128xf32>
    %265 = arith.negf %264 : vector<8x128xf32>
    %266 = math.exp %265 : vector<8x128xf32>
    %cst_68 = arith.constant 1.000000e+00 : f32
    %267 = vector.broadcast %cst_68 : f32 to vector<8x128xf32>
    %268 = arith.addf %267, %266 : vector<8x128xf32>
    %269 = arith.divf %267, %268 : vector<8x128xf32>
    %270 = arith.mulf %261, %239 : vector<8x128xf32>
    %271 = arith.mulf %255, %263 : vector<8x128xf32>
    %272 = arith.addf %270, %271 : vector<8x128xf32>
    %273 = math.tanh %272 : vector<8x128xf32>
    %274 = arith.mulf %269, %273 : vector<8x128xf32>
    %275 = arith.index_cast %245 : i32 to index
    %c0_69 = arith.constant 0 : index
    %276 = vector.load %arg5[%275, %c0_69] : memref<64x128xf32, #tpu.memory_space<vmem>>, vector<8x128xf32>
    tpu.vector_store %arg5[%275, %c0_69], %274 {strides = array<i32>} : memref<64x128xf32, #tpu.memory_space<vmem>>, vector<8x128xf32>,
    %c8_i32_70 = arith.constant 8 : i32
    %c0_71 = arith.constant 0 : index
    %c0_72 = arith.constant 0 : index
    %277 = vector.load %arg7[%c0_71, %c0_72] : memref<8x128xf32, #tpu.memory_space<vmem>>, vector<8x128xf32>
    tpu.vector_store %arg7[%c0_71, %c0_72], %274 {strides = array<i32>} : memref<8x128xf32, #tpu.memory_space<vmem>>, vector<8x128xf32>,
    %c0_73 = arith.constant 0 : index
    %c0_74 = arith.constant 0 : index
    %278 = vector.load %arg8[%c0_73, %c0_74] : memref<8x128xf32, #tpu.memory_space<vmem>>, vector<8x128xf32>
    tpu.vector_store %arg8[%c0_73, %c0_74], %272 {strides = array<i32>} : memref<8x128xf32, #tpu.memory_space<vmem>>, vector<8x128xf32>,
    return
  }
  func.func @transform_0(%arg0: i32) -> (i32, i32) {
    %c0_i32 = arith.constant 0 : i32
    %c0_i32_0 = arith.constant 0 : i32
    return %arg0, %c0_i32 : i32, i32
  }
  func.func @transform_1(%arg0: i32) -> (i32, i32) {
    %c0_i32 = arith.constant 0 : i32
    %c0_i32_0 = arith.constant 0 : i32
    %c0_i32_1 = arith.constant 0 : i32
    return %c0_i32, %c0_i32_0 : i32, i32
  }
  func.func @transform_2(%arg0: i32) -> (i32, i32) {
    %c0_i32 = arith.constant 0 : i32
    %c0_i32_0 = arith.constant 0 : i32
    %c0_i32_1 = arith.constant 0 : i32
    return %c0_i32, %c0_i32_0 : i32, i32
  }
  func.func @transform_3(%arg0: i32) -> (i32, i32) {
    %c0_i32 = arith.constant 0 : i32
    %c0_i32_0 = arith.constant 0 : i32
    %c0_i32_1 = arith.constant 0 : i32
    return %c0_i32, %c0_i32_0 : i32, i32
  }
  func.func @transform_4(%arg0: i32) -> (i32, i32) {
    %c0_i32 = arith.constant 0 : i32
    %c0_i32_0 = arith.constant 0 : i32
    return %arg0, %c0_i32 : i32, i32
  }
}

</mosaic_0001>

<llo_original>
// kernel: tpu_custom_call.1
$region0: #{tpu_custom_call.1}
  #allocation0 [shape = 'u32[]', space=smem, size = 0x4, offset = 0x4, fixed_abs, tag = 'smem constant byte address 0x4 - core index']
  #allocation1 [shape = 'u32[72,128]{1,0:T(1,128)}', space=vmem, size = 0x9000, scoped, tag = 'internal scratch']
  #allocation2 [shape = 'f32[64,512]{1,0:T(8,128)}', space=vmem, size = 0x20000, scoped, tag = 'scratch operand']
  #allocation3 [shape = 'f32[8,128]{1,0:T(8,128)}', space=vmem, size = 0x1000, scoped, tag = 'scratch operand']
  #allocation4 [shape = 'f32[8,128]{1,0:T(8,128)}', space=vmem, size = 0x1000, scoped, tag = 'scratch operand']
  %s0 = inlined_call_operand.vmem [shape: f32[64,4], index: 0, kind: input, shape index: {}]
  %s1 = inlined_call_operand.vmem [shape: f32[4,512], index: 1, kind: input, shape index: {}]
  %s2 = inlined_call_operand.hbm [shape: f32[128,512], index: 2, kind: input, shape index: {}]
  %s3 = inlined_call_operand.vmem [shape: f32[1,512], index: 3, kind: input, shape index: {}]
  %s4 = inlined_call_operand.hbm [shape: f32[64,128], index: 4, kind: output, shape index: {}]
  %s5 = sld [smem:[#allocation0]]
  $region34: #{tpu_custom_call.1} parent=0
    _
  %s7 = ssub.s32 1, %s5
  %s8 = scalar_select 0, %s7, %s5
  $region1: #{tpu_custom_call.1} parent=0
    #allocation5 [shape = 'u8[262144]{0}', space=vmem, size = 0x40000, scoped, tag = 'input window, operand 2, single buffered']
    #allocation6 [shape = 's32[1]{0}', space=sflag, size = 0x4, scoped, tag = 'scoped memory for tpu_custom_call.1']
    #allocation7 [shape = 's32[1]{0}', space=sflag, size = 0x4, scoped, tag = 'scoped memory for tpu_custom_call.1']
    #allocation8 [shape = 'u8[32768]{0}', space=vmem, size = 0x8000, scoped, tag = 'output window, operand 0, single buffered']
    %9 = vsyncpa [#allocation6], 0
    %10 = vsyncpa [#allocation7], 0
    // Predicated region
    $region2: #{tpu_custom_call.1} parent=1 // pred_check
      _
    $region3: #{tpu_custom_call.1} parent=1 // pred_check_branch
      %12 = sbr.rel (0) target = $region5
    $region4: #{tpu_custom_call.1} parent=1 // pred_region
      _
    $region5: #{tpu_custom_call.1} parent=1 // pred_fallthru
      _
    // Predicated region
    $region6: #{tpu_custom_call.1} parent=1 // pred_check
      _
    $region7: #{tpu_custom_call.1} parent=1 // pred_check_branch
      %14 = sbr.rel (0) target = $region9
    $region8: #{tpu_custom_call.1} parent=1 // pred_region
      _
    $region9: #{tpu_custom_call.1} parent=1 // pred_fallthru
      _
    // Predicated region
    $region10: #{tpu_custom_call.1} parent=1 // pred_check
      _
    $region11: #{tpu_custom_call.1} parent=1 // pred_check_branch
      %16 = sbr.rel (0) target = $region13
    $region12: #{tpu_custom_call.1} parent=1 // pred_region
      %18 = vsyncadd [#allocation6], 0
      %s19 = sshll.u32 %s2, 4
      %s20 = int_to_ptr.hbm [resolvable:$true] %s19
      %s21 = sshll.u32 [#allocation5], 4
      %s22 = int_to_ptr.vmem [resolvable:$true] %s21
      %27 = dma.hbm_to_vmem [thread:$0]  %s20, 8192, %s22, [#allocation6], 512, 512, 32
    $region13: #{tpu_custom_call.1} parent=1 // pred_fallthru
      _
    // Predicated region
    $region14: #{tpu_custom_call.1} parent=1 // pred_check
      _
    $region15: #{tpu_custom_call.1} parent=1 // pred_check_branch
      %29 = sbr.rel (0) target = $region17
    $region16: #{tpu_custom_call.1} parent=1 // pred_region
      _
    $region17: #{tpu_custom_call.1} parent=1 // pred_fallthru
      _
    // Predicated region
    $region18: #{tpu_custom_call.1} parent=1 // pred_check
      _
    $region19: #{tpu_custom_call.1} parent=1 // pred_check_branch
      %31 = sbr.rel (0) target = $region21
    $region20: #{tpu_custom_call.1} parent=1 // pred_region
      %33 = dma.done [#allocation6], 8192
    $region21: #{tpu_custom_call.1} parent=1 // pred_fallthru
      _
    %p34 = scmp.eq.s32.totalorder 0, 0
    // Predicated region
    $region22: #{tpu_custom_call.1} parent=1 // pred_check
      %p35 = pneg %p34
    $region23: #{tpu_custom_call.1} parent=1 // pred_check_branch
      %37 = sbr.rel (%p35) target = $region25
    $region24: #{tpu_custom_call.1} parent=1 // pred_region
      %38 = vst [vmem:[#allocation3] sm:$0xff] 0.0
      %39 = vst [vmem:[#allocation4] sm:$0xff] 0.0
    $region25: #{tpu_custom_call.1} parent=1 // pred_fallthru
      _
    %v40 = vld [vmem:[%s0] sm:$0xff]
    %v41 = vld [vmem:[%s0 + $0x8] sm:$0xff]
    %v42 = vld [vmem:[%s0 + $0x10] sm:$0xff]
    %v43 = vld [vmem:[%s0 + $0x18] sm:$0xff]
    %v44 = vld [vmem:[%s0 + $0x20] sm:$0xff]
    %v45 = vld [vmem:[%s0 + $0x28] sm:$0xff]
    %v46 = vld [vmem:[%s0 + $0x30] sm:$0xff]
    %v47 = vld [vmem:[%s0 + $0x38] sm:$0xff]
    %v48 = vld [vmem:[%s1] sm:$0xff]
    %v49 = vld [vmem:[%s1 + $0x8] sm:$0xff]
    %v50 = vld [vmem:[%s3] sm:$0xf]
    %v52 = vperm.slane %v50, 0
    %v53 = vperm.slane %v50, 1
    %v54 = vperm.slane %v50, 2
    %v55 = vperm.slane %v50, 3
    %62 = vst [vmem:[#allocation1] ss:$2 sm:$0xff] %v48
    %s63 = scalar_lea.vmem [#allocation1], 16
    %64 = vst [vmem:[%s63] ss:$2 sm:$0xff] %v49
    %v65 = vld.sshfl [vmem:[#allocation1] sm:$0xff pattern:$0x75316420]
    %v66 = vld.sshfl [vmem:[#allocation1 + $0x8] sm:$0xff pattern:$0x75316420]
    %v67 = vld.sshfl [vmem:[#allocation1 + $0x10] sm:$0xff pattern:$0x75316420]
    %v68 = vld.sshfl [vmem:[#allocation1 + $0x18] sm:$0xff pattern:$0x75316420]
    %vm69 = vcmask 31744
    %v71 = vsel %vm69, %v40, 0
    %v74 = vsel %vm69, %v41, 0
    %v77 = vsel %vm69, %v42, 0
    %v80 = vsel %vm69, %v43, 0
    %v83 = vsel %vm69, %v44, 0
    %v86 = vsel %vm69, %v45, 0
    %v89 = vsel %vm69, %v46, 0
    %v92 = vsel %vm69, %v47, 0
    %vm94 = vcmask 1043456
    %v95 = vsel %vm94, %v65, 0
    %v97 = vsel %vm94, %v66, 0
    %v99 = vsel %vm94, %v67, 0
    %v101 = vsel %vm94, %v68, 0
    %103 = vmatpush.msra.mxu0 0.0
    %104 = vmatpush.msra.mxu0 0.0
    %105 = vmatpush.msra.mxu0 0.0
    %106 = vmatpush.msra.mxu0 0.0
    %107 = vmatpush.msra.mxu0 0.0
    %108 = vmatpush.msra.mxu0 0.0
    %109 = vmatpush.msra.mxu0 0.0
    %110 = vmatpush.msra.mxu0 0.0
    %111 = vmatpush.msra.mxu0 0.0
    %112 = vmatpush.msra.mxu0 0.0
    %113 = vmatpush.msra.mxu0 0.0
    %114 = vmatpush.msra.mxu0 0.0
    %115 = vmatpush.msra.mxu0 0.0
    %116 = vmatpush.msra.mxu0 0.0
    %117 = vmatpush.msra.mxu0 0.0
    %118 = vmatpush.msra.mxu0 %v95
    %119 = vmatmul.f32.gmra.mxu0 %v71
    %v120 = vpop.f32.mrf.mxu0
    %v121 = vadd.f32 %v52, %v120
    %122 = vmatmul.f32.gmra.mxu0 %v74
    %v123 = vpop.f32.mrf.mxu0
    %v124 = vadd.f32 %v52, %v123
    %125 = vmatmul.f32.gmra.mxu0 %v77
    %v126 = vpop.f32.mrf.mxu0
    %v127 = vadd.f32 %v52, %v126
    %128 = vmatmul.f32.gmra.mxu0 %v80
    %v129 = vpop.f32.mrf.mxu0
    %v130 = vadd.f32 %v52, %v129
    %131 = vmatmul.f32.gmra.mxu0 %v83
    %v132 = vpop.f32.mrf.mxu0
    %v133 = vadd.f32 %v52, %v132
    %134 = vmatmul.f32.gmra.mxu0 %v86
    %v135 = vpop.f32.mrf.mxu0
    %v136 = vadd.f32 %v52, %v135
    %137 = vmatmul.f32.gmra.mxu0 %v89
    %v138 = vpop.f32.mrf.mxu0
    %v139 = vadd.f32 %v52, %v138
    %140 = vmatmul.f32.gmra.mxu0 %v92
    %v141 = vpop.f32.mrf.mxu0
    %v142 = vadd.f32 %v52, %v141
    %143 = vdwg.mxu0
    %144 = vmatpush.msra.mxu0 0.0
    %145 = vmatpush.msra.mxu0 0.0
    %146 = vmatpush.msra.mxu0 0.0
    %147 = vmatpush.msra.mxu0 0.0
    %148 = vmatpush.msra.mxu0 0.0
    %149 = vmatpush.msra.mxu0 0.0
    %150 = vmatpush.msra.mxu0 0.0
    %151 = vmatpush.msra.mxu0 0.0
    %152 = vmatpush.msra.mxu0 0.0
    %153 = vmatpush.msra.mxu0 0.0
    %154 = vmatpush.msra.mxu0 0.0
    %155 = vmatpush.msra.mxu0 0.0
    %156 = vmatpush.msra.mxu0 0.0
    %157 = vmatpush.msra.mxu0 0.0
    %158 = vmatpush.msra.mxu0 0.0
    %159 = vmatpush.msra.mxu0 %v97
    %160 = vmatmul.f32.gmra.mxu0 %v71
    %v161 = vpop.f32.mrf.mxu0
    %v162 = vadd.f32 %v53, %v161
    %163 = vmatmul.f32.gmra.mxu0 %v74
    %v164 = vpop.f32.mrf.mxu0
    %v165 = vadd.f32 %v53, %v164
    %166 = vmatmul.f32.gmra.mxu0 %v77
    %v167 = vpop.f32.mrf.mxu0
    %v168 = vadd.f32 %v53, %v167
    %169 = vmatmul.f32.gmra.mxu0 %v80
    %v170 = vpop.f32.mrf.mxu0
    %v171 = vadd.f32 %v53, %v170
    %172 = vmatmul.f32.gmra.mxu0 %v83
    %v173 = vpop.f32.mrf.mxu0
    %v174 = vadd.f32 %v53, %v173
    %175 = vmatmul.f32.gmra.mxu0 %v86
    %v176 = vpop.f32.mrf.mxu0
    %v177 = vadd.f32 %v53, %v176
    %178 = vmatmul.f32.gmra.mxu0 %v89
    %v179 = vpop.f32.mrf.mxu0
    %v180 = vadd.f32 %v53, %v179
    %181 = vmatmul.f32.gmra.mxu0 %v92
    %v182 = vpop.f32.mrf.mxu0
    %v183 = vadd.f32 %v53, %v182
    %184 = vdwg.mxu0
    %185 = vmatpush.msra.mxu0 0.0
    %186 = vmatpush.msra.mxu0 0.0
    %187 = vmatpush.msra.mxu0 0.0
    %188 = vmatpush.msra.mxu0 0.0
    %189 = vmatpush.msra.mxu0 0.0
    %190 = vmatpush.msra.mxu0 0.0
    %191 = vmatpush.msra.mxu0 0.0
    %192 = vmatpush.msra.mxu0 0.0
    %193 = vmatpush.msra.mxu0 0.0
    %194 = vmatpush.msra.mxu0 0.0
    %195 = vmatpush.msra.mxu0 0.0
    %196 = vmatpush.msra.mxu0 0.0
    %197 = vmatpush.msra.mxu0 0.0
    %198 = vmatpush.msra.mxu0 0.0
    %199 = vmatpush.msra.mxu0 0.0
    %200 = vmatpush.msra.mxu0 %v99
    %201 = vmatmul.f32.gmra.mxu0 %v71
    %v202 = vpop.f32.mrf.mxu0
    %v203 = vadd.f32 %v54, %v202
    %204 = vmatmul.f32.gmra.mxu0 %v74
    %v205 = vpop.f32.mrf.mxu0
    %v206 = vadd.f32 %v54, %v205
    %207 = vmatmul.f32.gmra.mxu0 %v77
    %v208 = vpop.f32.mrf.mxu0
    %v209 = vadd.f32 %v54, %v208
    %210 = vmatmul.f32.gmra.mxu0 %v80
    %v211 = vpop.f32.mrf.mxu0
    %v212 = vadd.f32 %v54, %v211
    %213 = vmatmul.f32.gmra.mxu0 %v83
    %v214 = vpop.f32.mrf.mxu0
    %v215 = vadd.f32 %v54, %v214
    %216 = vmatmul.f32.gmra.mxu0 %v86
    %v217 = vpop.f32.mrf.mxu0
    %v218 = vadd.f32 %v54, %v217
    %219 = vmatmul.f32.gmra.mxu0 %v89
    %v220 = vpop.f32.mrf.mxu0
    %v221 = vadd.f32 %v54, %v220
    %222 = vmatmul.f32.gmra.mxu0 %v92
    %v223 = vpop.f32.mrf.mxu0
    %v224 = vadd.f32 %v54, %v223
    %225 = vdwg.mxu0
    %226 = vmatpush.msra.mxu0 0.0
    %227 = vmatpush.msra.mxu0 0.0
    %228 = vmatpush.msra.mxu0 0.0
    %229 = vmatpush.msra.mxu0 0.0
    %230 = vmatpush.msra.mxu0 0.0
    %231 = vmatpush.msra.mxu0 0.0
    %232 = vmatpush.msra.mxu0 0.0
    %233 = vmatpush.msra.mxu0 0.0
    %234 = vmatpush.msra.mxu0 0.0
    %235 = vmatpush.msra.mxu0 0.0
    %236 = vmatpush.msra.mxu0 0.0
    %237 = vmatpush.msra.mxu0 0.0
    %238 = vmatpush.msra.mxu0 0.0
    %239 = vmatpush.msra.mxu0 0.0
    %240 = vmatpush.msra.mxu0 0.0
    %241 = vmatpush.msra.mxu0 %v101
    %242 = vmatmul.f32.gmra.mxu0 %v71
    %v243 = vpop.f32.mrf.mxu0
    %v244 = vadd.f32 %v55, %v243
    %245 = vmatmul.f32.gmra.mxu0 %v74
    %v246 = vpop.f32.mrf.mxu0
    %v247 = vadd.f32 %v55, %v246
    %248 = vmatmul.f32.gmra.mxu0 %v77
    %v249 = vpop.f32.mrf.mxu0
    %v250 = vadd.f32 %v55, %v249
    %251 = vmatmul.f32.gmra.mxu0 %v80
    %v252 = vpop.f32.mrf.mxu0
    %v253 = vadd.f32 %v55, %v252
    %254 = vmatmul.f32.gmra.mxu0 %v83
    %v255 = vpop.f32.mrf.mxu0
    %v256 = vadd.f32 %v55, %v255
    %257 = vmatmul.f32.gmra.mxu0 %v86
    %v258 = vpop.f32.mrf.mxu0
    %v259 = vadd.f32 %v55, %v258
    %260 = vmatmul.f32.gmra.mxu0 %v89
    %v261 = vpop.f32.mrf.mxu0
    %v262 = vadd.f32 %v55, %v261
    %263 = vmatmul.f32.gmra.mxu0 %v92
    %v264 = vpop.f32.mrf.mxu0
    %v265 = vadd.f32 %v55, %v264
    %266 = vdwg.mxu0
    %267 = vst [vmem:[#allocation2] sm:$0xff] %v121
    %268 = vst [vmem:[#allocation2 + $0x8] sm:$0xff] %v162
    %269 = vst [vmem:[#allocation2 + $0x10] sm:$0xff] %v203
    %270 = vst [vmem:[#allocation2 + $0x18] sm:$0xff] %v244
    %271 = vst [vmem:[#allocation2 + $0x20] sm:$0xff] %v124
    %272 = vst [vmem:[#allocation2 + $0x28] sm:$0xff] %v165
    %273 = vst [vmem:[#allocation2 + $0x30] sm:$0xff] %v206
    %274 = vst [vmem:[#allocation2 + $0x38] sm:$0xff] %v247
    %275 = vst [vmem:[#allocation2 + $0x40] sm:$0xff] %v127
    %276 = vst [vmem:[#allocation2 + $0x48] sm:$0xff] %v168
    %277 = vst [vmem:[#allocation2 + $0x50] sm:$0xff] %v209
    %278 = vst [vmem:[#allocation2 + $0x58] sm:$0xff] %v250
    %279 = vst [vmem:[#allocation2 + $0x60] sm:$0xff] %v130
    %280 = vst [vmem:[#allocation2 + $0x68] sm:$0xff] %v171
    %281 = vst [vmem:[#allocation2 + $0x70] sm:$0xff] %v212
    %282 = vst [vmem:[#allocation2 + $0x78] sm:$0xff] %v253
    %283 = vst [vmem:[#allocation2 + $0x80] sm:$0xff] %v133
    %284 = vst [vmem:[#allocation2 + $0x88] sm:$0xff] %v174
    %285 = vst [vmem:[#allocation2 + $0x90] sm:$0xff] %v215
    %286 = vst [vmem:[#allocation2 + $0x98] sm:$0xff] %v256
    %287 = vst [vmem:[#allocation2 + $0xa0] sm:$0xff] %v136
    %288 = vst [vmem:[#allocation2 + $0xa8] sm:$0xff] %v177
    %289 = vst [vmem:[#allocation2 + $0xb0] sm:$0xff] %v218
    %290 = vst [vmem:[#allocation2 + $0xb8] sm:$0xff] %v259
    %291 = vst [vmem:[#allocation2 + $0xc0] sm:$0xff] %v139
    %292 = vst [vmem:[#allocation2 + $0xc8] sm:$0xff] %v180
    %293 = vst [vmem:[#allocation2 + $0xd0] sm:$0xff] %v221
    %294 = vst [vmem:[#allocation2 + $0xd8] sm:$0xff] %v262
    %295 = vst [vmem:[#allocation2 + $0xe0] sm:$0xff] %v142
    %296 = vst [vmem:[#allocation2 + $0xe8] sm:$0xff] %v183
    %297 = vst [vmem:[#allocation2 + $0xf0] sm:$0xff] %v224
    %298 = vst [vmem:[#allocation2 + $0xf8] sm:$0xff] %v265
    %v299 = vld [vmem:[#allocation5] sm:$0xff]
    %v300 = vld [vmem:[#allocation5 + $0x8] sm:$0xff]
    %v301 = vld [vmem:[#allocation5 + $0x10] sm:$0xff]
    %v302 = vld [vmem:[#allocation5 + $0x18] sm:$0xff]
    %v303 = vld [vmem:[#allocation5 + $0x20] sm:$0xff]
    %v304 = vld [vmem:[#allocation5 + $0x28] sm:$0xff]
    %v305 = vld [vmem:[#allocation5 + $0x30] sm:$0xff]
    %v306 = vld [vmem:[#allocation5 + $0x38] sm:$0xff]
    %v307 = vld [vmem:[#allocation5 + $0x40] sm:$0xff]
    %v308 = vld [vmem:[#allocation5 + $0x48] sm:$0xff]
    %v309 = vld [vmem:[#allocation5 + $0x50] sm:$0xff]
    %v310 = vld [vmem:[#allocation5 + $0x58] sm:$0xff]
    %v311 = vld [vmem:[#allocation5 + $0x60] sm:$0xff]
    %v312 = vld [vmem:[#allocation5 + $0x68] sm:$0xff]
    %v313 = vld [vmem:[#allocation5 + $0x70] sm:$0xff]
    %v314 = vld [vmem:[#allocation5 + $0x78] sm:$0xff]
    %v315 = vld [vmem:[#allocation5 + $0x80] sm:$0xff]
    %v316 = vld [vmem:[#allocation5 + $0x88] sm:$0xff]
    %v317 = vld [vmem:[#allocation5 + $0x90] sm:$0xff]
    %v318 = vld [vmem:[#allocation5 + $0x98] sm:$0xff]
    %v319 = vld [vmem:[#allocation5 + $0xa0] sm:$0xff]
    %v320 = vld [vmem:[#allocation5 + $0xa8] sm:$0xff]
    %v321 = vld [vmem:[#allocation5 + $0xb0] sm:$0xff]
    %v322 = vld [vmem:[#allocation5 + $0xb8] sm:$0xff]
    %v323 = vld [vmem:[#allocation5 + $0xc0] sm:$0xff]
    %v324 = vld [vmem:[#allocation5 + $0xc8] sm:$0xff]
    %v325 = vld [vmem:[#allocation5 + $0xd0] sm:$0xff]
    %v326 = vld [vmem:[#allocation5 + $0xd8] sm:$0xff]
    %v327 = vld [vmem:[#allocation5 + $0xe0] sm:$0xff]
    %v328 = vld [vmem:[#allocation5 + $0xe8] sm:$0xff]
    %v329 = vld [vmem:[#allocation5 + $0xf0] sm:$0xff]
    %v330 = vld [vmem:[#allocation5 + $0xf8] sm:$0xff]
    %v331 = vld [vmem:[#allocation5 + $0x100] sm:$0xff]
    %v332 = vld [vmem:[#allocation5 + $0x108] sm:$0xff]
    %v333 = vld [vmem:[#allocation5 + $0x110] sm:$0xff]
    %v334 = vld [vmem:[#allocation5 + $0x118] sm:$0xff]
    %v335 = vld [vmem:[#allocation5 + $0x120] sm:$0xff]
    %v336 = vld [vmem:[#allocation5 + $0x128] sm:$0xff]
    %v337 = vld [vmem:[#allocation5 + $0x130] sm:$0xff]
    %v338 = vld [vmem:[#allocation5 + $0x138] sm:$0xff]
    %v339 = vld [vmem:[#allocation5 + $0x140] sm:$0xff]
    %v340 = vld [vmem:[#allocation5 + $0x148] sm:$0xff]
    %v341 = vld [vmem:[#allocation5 + $0x150] sm:$0xff]
    %v342 = vld [vmem:[#allocation5 + $0x158] sm:$0xff]
    %v343 = vld [vmem:[#allocation5 + $0x160] sm:$0xff]
    %v344 = vld [vmem:[#allocation5 + $0x168] sm:$0xff]
    %v345 = vld [vmem:[#allocation5 + $0x170] sm:$0xff]
    %v346 = vld [vmem:[#allocation5 + $0x178] sm:$0xff]
    %v347 = vld [vmem:[#allocation5 + $0x180] sm:$0xff]
    %v348 = vld [vmem:[#allocation5 + $0x188] sm:$0xff]
    %v349 = vld [vmem:[#allocation5 + $0x190] sm:$0xff]
    %v350 = vld [vmem:[#allocation5 + $0x198] sm:$0xff]
    %v351 = vld [vmem:[#allocation5 + $0x1a0] sm:$0xff]
    %v352 = vld [vmem:[#allocation5 + $0x1a8] sm:$0xff]
    %v353 = vld [vmem:[#allocation5 + $0x1b0] sm:$0xff]
    %v354 = vld [vmem:[#allocation5 + $0x1b8] sm:$0xff]
    %v355 = vld [vmem:[#allocation5 + $0x1c0] sm:$0xff]
    %v356 = vld [vmem:[#allocation5 + $0x1c8] sm:$0xff]
    %v357 = vld [vmem:[#allocation5 + $0x1d0] sm:$0xff]
    %v358 = vld [vmem:[#allocation5 + $0x1d8] sm:$0xff]
    %v359 = vld [vmem:[#allocation5 + $0x1e0] sm:$0xff]
    %v360 = vld [vmem:[#allocation5 + $0x1e8] sm:$0xff]
    %v361 = vld [vmem:[#allocation5 + $0x1f0] sm:$0xff]
    %v362 = vld [vmem:[#allocation5 + $0x1f8] sm:$0xff]
    %v363 = vld [vmem:[#allocation3] sm:$0xff]
    %v364 = vld [vmem:[#allocation4] sm:$0xff]
    %s365 = smul.u32 0, 4
    %s366 = smul.addr %s365, 8
    %s367 = scalar_lea.vmem [#allocation2], %s366
    %v368 = vld [vmem:[%s367] sm:$0xff]
    %v369 = vld [vmem:[%s367 + $0x8] sm:$0xff]
    %v370 = vld [vmem:[%s367 + $0x10] sm:$0xff]
    %v371 = vld [vmem:[%s367 + $0x18] sm:$0xff]
    %372 = vmatpush.msra.mxu0 %v359
    %373 = vmatpush.msra.mxu0 %v355
    %374 = vmatpush.msra.mxu0 %v351
    %375 = vmatpush.msra.mxu0 %v347
    %376 = vmatpush.msra.mxu0 %v343
    %377 = vmatpush.msra.mxu0 %v339
    %378 = vmatpush.msra.mxu0 %v335
    %379 = vmatpush.msra.mxu0 %v331
    %380 = vmatpush.msra.mxu0 %v327
    %381 = vmatpush.msra.mxu0 %v323
    %382 = vmatpush.msra.mxu0 %v319
    %383 = vmatpush.msra.mxu0 %v315
    %384 = vmatpush.msra.mxu0 %v311
    %385 = vmatpush.msra.mxu0 %v307
    %386 = vmatpush.msra.mxu0 %v303
    %387 = vmatpush.msra.mxu0 %v299
    %388 = vmatmul.f32.gmra.mxu0 %v363
    %v389 = vpop.f32.mrf.mxu0
    %v390 = vadd.f32 0.0, %v389
    %391 = vdwg.mxu0
    %392 = vmatpush.msra.mxu0 %v360
    %393 = vmatpush.msra.mxu0 %v356
    %394 = vmatpush.msra.mxu0 %v352
    %395 = vmatpush.msra.mxu0 %v348
    %396 = vmatpush.msra.mxu0 %v344
    %397 = vmatpush.msra.mxu0 %v340
    %398 = vmatpush.msra.mxu0 %v336
    %399 = vmatpush.msra.mxu0 %v332
    %400 = vmatpush.msra.mxu0 %v328
    %401 = vmatpush.msra.mxu0 %v324
    %402 = vmatpush.msra.mxu0 %v320
    %403 = vmatpush.msra.mxu0 %v316
    %404 = vmatpush.msra.mxu0 %v312
    %405 = vmatpush.msra.mxu0 %v308
    %406 = vmatpush.msra.mxu0 %v304
    %407 = vmatpush.msra.mxu0 %v300
    %408 = vmatmul.f32.gmra.mxu0 %v363
    %v409 = vpop.f32.mrf.mxu0
    %v410 = vadd.f32 0.0, %v409
    %411 = vdwg.mxu0
    %412 = vmatpush.msra.mxu0 %v361
    %413 = vmatpush.msra.mxu0 %v357
    %414 = vmatpush.msra.mxu0 %v353
    %415 = vmatpush.msra.mxu0 %v349
    %416 = vmatpush.msra.mxu0 %v345
    %417 = vmatpush.msra.mxu0 %v341
    %418 = vmatpush.msra.mxu0 %v337
    %419 = vmatpush.msra.mxu0 %v333
    %420 = vmatpush.msra.mxu0 %v329
    %421 = vmatpush.msra.mxu0 %v325
    %422 = vmatpush.msra.mxu0 %v321
    %423 = vmatpush.msra.mxu0 %v317
    %424 = vmatpush.msra.mxu0 %v313
    %425 = vmatpush.msra.mxu0 %v309
    %426 = vmatpush.msra.mxu0 %v305
    %427 = vmatpush.msra.mxu0 %v301
    %428 = vmatmul.f32.gmra.mxu0 %v363
    %v429 = vpop.f32.mrf.mxu0
    %v430 = vadd.f32 0.0, %v429
    %431 = vdwg.mxu0
    %432 = vmatpush.msra.mxu0 %v362
    %433 = vmatpush.msra.mxu0 %v358
    %434 = vmatpush.msra.mxu0 %v354
    %435 = vmatpush.msra.mxu0 %v350
    %436 = vmatpush.msra.mxu0 %v346
    %437 = vmatpush.msra.mxu0 %v342
    %438 = vmatpush.msra.mxu0 %v338
    %439 = vmatpush.msra.mxu0 %v334
    %440 = vmatpush.msra.mxu0 %v330
    %441 = vmatpush.msra.mxu0 %v326
    %442 = vmatpush.msra.mxu0 %v322
    %443 = vmatpush.msra.mxu0 %v318
    %444 = vmatpush.msra.mxu0 %v314
    %445 = vmatpush.msra.mxu0 %v310
    %446 = vmatpush.msra.mxu0 %v306
    %447 = vmatpush.msra.mxu0 %v302
    %448 = vmatmul.f32.gmra.mxu0 %v363
    %v449 = vpop.f32.mrf.mxu0
    %v450 = vadd.f32 0.0, %v449
    %451 = vdwg.mxu0
    %v452 = vadd.f32 %v368, %v390
    %v453 = vadd.f32 %v369, %v410
    %v454 = vadd.f32 %v370, %v430
    %v455 = vadd.f32 %v371, %v450
    %v456 = vxor.u32 %v452, 2147483648
    %v457 = vmul.f32 %v456, 1.442695
    %v458 = vpow.pop %v457
    %v459 = vadd.f32 %v458, 1.0
    %v460 = vrcp.pop %v459
    %v461 = vmul.f32 %v459, %v460
    %v462 = vsub.f32 1.0, %v461
    %v463 = vmul.f32 %v460, %v462
    %v464 = vadd.f32 %v460, %v463
    %vm465 = vweird.f32 %v459
    %vm466 = vweird.f32 %v460
    %vm467 = vmor %vm465, %vm466
    %v468 = vsel %vm467, %v460, %v464
    %v469 = vand.u32 2147483647, %v459
    %vm470 = vcmp.eq.f32.partialorder %v469, 8.507059e+37
    %v471 = vand.u32 %v459, 2147483648
    %v472 = vor.u32 1.1754944e-38, %v471
    %v473 = vsel %vm470, %v472, %v468
    %v474 = vmul.f32 1.0, %v473
    %v475 = vxor.u32 %v453, 2147483648
    %v476 = vmul.f32 %v475, 1.442695
    %v477 = vpow.pop %v476
    %v478 = vadd.f32 %v477, 1.0
    %v479 = vrcp.pop %v478
    %v480 = vmul.f32 %v478, %v479
    %v481 = vsub.f32 1.0, %v480
    %v482 = vmul.f32 %v479, %v481
    %v483 = vadd.f32 %v479, %v482
    %vm484 = vweird.f32 %v478
    %vm485 = vweird.f32 %v479
    %vm486 = vmor %vm484, %vm485
    %v487 = vsel %vm486, %v479, %v483
    %v488 = vand.u32 2147483647, %v478
    %vm489 = vcmp.eq.f32.partialorder %v488, 8.507059e+37
    %v490 = vand.u32 %v478, 2147483648
    %v491 = vor.u32 1.1754944e-38, %v490
    %v492 = vsel %vm489, %v491, %v487
    %v493 = vmul.f32 1.0, %v492
    %v494 = vtanh.pop %v454
    %v495 = vxor.u32 %v455, 2147483648
    %v496 = vmul.f32 %v495, 1.442695
    %v497 = vpow.pop %v496
    %v498 = vadd.f32 %v497, 1.0
    %v499 = vrcp.pop %v498
    %v500 = vmul.f32 %v498, %v499
    %v501 = vsub.f32 1.0, %v500
    %v502 = vmul.f32 %v499, %v501
    %v503 = vadd.f32 %v499, %v502
    %vm504 = vweird.f32 %v498
    %vm505 = vweird.f32 %v499
    %vm506 = vmor %vm504, %vm505
    %v507 = vsel %vm506, %v499, %v503
    %v508 = vand.u32 2147483647, %v498
    %vm509 = vcmp.eq.f32.partialorder %v508, 8.507059e+37
    %v510 = vand.u32 %v498, 2147483648
    %v511 = vor.u32 1.1754944e-38, %v510
    %v512 = vsel %vm509, %v511, %v507
    %v513 = vmul.f32 1.0, %v512
    %v514 = vmul.f32 %v493, %v364
    %v515 = vmul.f32 %v474, %v494
    %v516 = vadd.f32 %v514, %v515
    %v517 = vtanh.pop %v516
    %v518 = vmul.f32 %v513, %v517
    %519 = vst [vmem:[#allocation8] sm:$0xff] %v518
    %s520 = smul.u32 1, 4
    %s521 = smul.addr %s520, 8
    %s522 = scalar_lea.vmem [#allocation2], %s521
    %v523 = vld [vmem:[%s522] sm:$0xff]
    %v524 = vld [vmem:[%s522 + $0x8] sm:$0xff]
    %v525 = vld [vmem:[%s522 + $0x10] sm:$0xff]
    %v526 = vld [vmem:[%s522 + $0x18] sm:$0xff]
    %527 = vmatpush.msra.mxu0 %v359
    %528 = vmatpush.msra.mxu0 %v355
    %529 = vmatpush.msra.mxu0 %v351
    %530 = vmatpush.msra.mxu0 %v347
    %531 = vmatpush.msra.mxu0 %v343
    %532 = vmatpush.msra.mxu0 %v339
    %533 = vmatpush.msra.mxu0 %v335
    %534 = vmatpush.msra.mxu0 %v331
    %535 = vmatpush.msra.mxu0 %v327
    %536 = vmatpush.msra.mxu0 %v323
    %537 = vmatpush.msra.mxu0 %v319
    %538 = vmatpush.msra.mxu0 %v315
    %539 = vmatpush.msra.mxu0 %v311
    %540 = vmatpush.msra.mxu0 %v307
    %541 = vmatpush.msra.mxu0 %v303
    %542 = vmatpush.msra.mxu0 %v299
    %543 = vmatmul.f32.gmra.mxu0 %v518
    %v544 = vpop.f32.mrf.mxu0
    %v545 = vadd.f32 0.0, %v544
    %546 = vdwg.mxu0
    %547 = vmatpush.msra.mxu0 %v360
    %548 = vmatpush.msra.mxu0 %v356
    %549 = vmatpush.msra.mxu0 %v352
    %550 = vmatpush.msra.mxu0 %v348
    %551 = vmatpush.msra.mxu0 %v344
    %552 = vmatpush.msra.mxu0 %v340
    %553 = vmatpush.msra.mxu0 %v336
    %554 = vmatpush.msra.mxu0 %v332
    %555 = vmatpush.msra.mxu0 %v328
    %556 = vmatpush.msra.mxu0 %v324
    %557 = vmatpush.msra.mxu0 %v320
    %558 = vmatpush.msra.mxu0 %v316
    %559 = vmatpush.msra.mxu0 %v312
    %560 = vmatpush.msra.mxu0 %v308
    %561 = vmatpush.msra.mxu0 %v304
    %562 = vmatpush.msra.mxu0 %v300
    %563 = vmatmul.f32.gmra.mxu0 %v518
    %v564 = vpop.f32.mrf.mxu0
    %v565 = vadd.f32 0.0, %v564
    %566 = vdwg.mxu0
    %567 = vmatpush.msra.mxu0 %v361
    %568 = vmatpush.msra.mxu0 %v357
    %569 = vmatpush.msra.mxu0 %v353
    %570 = vmatpush.msra.mxu0 %v349
    %571 = vmatpush.msra.mxu0 %v345
    %572 = vmatpush.msra.mxu0 %v341
    %573 = vmatpush.msra.mxu0 %v337
    %574 = vmatpush.msra.mxu0 %v333
    %575 = vmatpush.msra.mxu0 %v329
    %576 = vmatpush.msra.mxu0 %v325
    %577 = vmatpush.msra.mxu0 %v321
    %578 = vmatpush.msra.mxu0 %v317
    %579 = vmatpush.msra.mxu0 %v313
    %580 = vmatpush.msra.mxu0 %v309
    %581 = vmatpush.msra.mxu0 %v305
    %582 = vmatpush.msra.mxu0 %v301
    %583 = vmatmul.f32.gmra.mxu0 %v518
    %v584 = vpop.f32.mrf.mxu0
    %v585 = vadd.f32 0.0, %v584
    %586 = vdwg.mxu0
    %587 = vmatpush.msra.mxu0 %v362
    %588 = vmatpush.msra.mxu0 %v358
    %589 = vmatpush.msra.mxu0 %v354
    %590 = vmatpush.msra.mxu0 %v350
    %591 = vmatpush.msra.mxu0 %v346
    %592 = vmatpush.msra.mxu0 %v342
    %593 = vmatpush.msra.mxu0 %v338
    %594 = vmatpush.msra.mxu0 %v334
    %595 = vmatpush.msra.mxu0 %v330
    %596 = vmatpush.msra.mxu0 %v326
    %597 = vmatpush.msra.mxu0 %v322
    %598 = vmatpush.msra.mxu0 %v318
    %599 = vmatpush.msra.mxu0 %v314
    %600 = vmatpush.msra.mxu0 %v310
    %601 = vmatpush.msra.mxu0 %v306
    %602 = vmatpush.msra.mxu0 %v302
    %603 = vmatmul.f32.gmra.mxu0 %v518
    %v604 = vpop.f32.mrf.mxu0
    %v605 = vadd.f32 0.0, %v604
    %606 = vdwg.mxu0
    %v607 = vadd.f32 %v523, %v545
    %v608 = vadd.f32 %v524, %v565
    %v609 = vadd.f32 %v525, %v585
    %v610 = vadd.f32 %v526, %v605
    %v611 = vxor.u32 %v607, 2147483648
    %v612 = vmul.f32 %v611, 1.442695
    %v613 = vpow.pop %v612
    %v614 = vadd.f32 %v613, 1.0
    %v615 = vrcp.pop %v614
    %v616 = vmul.f32 %v614, %v615
    %v617 = vsub.f32 1.0, %v616
    %v618 = vmul.f32 %v615, %v617
    %v619 = vadd.f32 %v615, %v618
    %vm620 = vweird.f32 %v614
    %vm621 = vweird.f32 %v615
    %vm622 = vmor %vm620, %vm621
    %v623 = vsel %vm622, %v615, %v619
    %v624 = vand.u32 2147483647, %v614
    %vm625 = vcmp.eq.f32.partialorder %v624, 8.507059e+37
    %v626 = vand.u32 %v614, 2147483648
    %v627 = vor.u32 1.1754944e-38, %v626
    %v628 = vsel %vm625, %v627, %v623
    %v629 = vmul.f32 1.0, %v628
    %v630 = vxor.u32 %v608, 2147483648
    %v631 = vmul.f32 %v630, 1.442695
    %v632 = vpow.pop %v631
    %v633 = vadd.f32 %v632, 1.0
    %v634 = vrcp.pop %v633
    %v635 = vmul.f32 %v633, %v634
    %v636 = vsub.f32 1.0, %v635
    %v637 = vmul.f32 %v634, %v636
    %v638 = vadd.f32 %v634, %v637
    %vm639 = vweird.f32 %v633
    %vm640 = vweird.f32 %v634
    %vm641 = vmor %vm639, %vm640
    %v642 = vsel %vm641, %v634, %v638
    %v643 = vand.u32 2147483647, %v633
    %vm644 = vcmp.eq.f32.partialorder %v643, 8.507059e+37
    %v645 = vand.u32 %v633, 2147483648
    %v646 = vor.u32 1.1754944e-38, %v645
    %v647 = vsel %vm644, %v646, %v642
    %v648 = vmul.f32 1.0, %v647
    %v649 = vtanh.pop %v609
    %v650 = vxor.u32 %v610, 2147483648
    %v651 = vmul.f32 %v650, 1.442695
    %v652 = vpow.pop %v651
    %v653 = vadd.f32 %v652, 1.0
    %v654 = vrcp.pop %v653
    %v655 = vmul.f32 %v653, %v654
    %v656 = vsub.f32 1.0, %v655
    %v657 = vmul.f32 %v654, %v656
    %v658 = vadd.f32 %v654, %v657
    %vm659 = vweird.f32 %v653
    %vm660 = vweird.f32 %v654
    %vm661 = vmor %vm659, %vm660
    %v662 = vsel %vm661, %v654, %v658
    %v663 = vand.u32 2147483647, %v653
    %vm664 = vcmp.eq.f32.partialorder %v663, 8.507059e+37
    %v665 = vand.u32 %v653, 2147483648
    %v666 = vor.u32 1.1754944e-38, %v665
    %v667 = vsel %vm664, %v666, %v662
    %v668 = vmul.f32 1.0, %v667
    %v669 = vmul.f32 %v648, %v516
    %v670 = vmul.f32 %v629, %v649
    %v671 = vadd.f32 %v669, %v670
    %v672 = vtanh.pop %v671
    %v673 = vmul.f32 %v668, %v672
    %s674 = scalar_lea.vmem [#allocation8], 8
    %675 = vst [vmem:[%s674] sm:$0xff] %v673
    %s676 = smul.u32 2, 4
    %s677 = smul.addr %s676, 8
    %s678 = scalar_lea.vmem [#allocation2], %s677
    %v679 = vld [vmem:[%s678] sm:$0xff]
    %v680 = vld [vmem:[%s678 + $0x8] sm:$0xff]
    %v681 = vld [vmem:[%s678 + $0x10] sm:$0xff]
    %v682 = vld [vmem:[%s678 + $0x18] sm:$0xff]
    %683 = vmatpush.msra.mxu0 %v359
    %684 = vmatpush.msra.mxu0 %v355
    %685 = vmatpush.msra.mxu0 %v351
    %686 = vmatpush.msra.mxu0 %v347
    %687 = vmatpush.msra.mxu0 %v343
    %688 = vmatpush.msra.mxu0 %v339
    %689 = vmatpush.msra.mxu0 %v335
    %690 = vmatpush.msra.mxu0 %v331
    %691 = vmatpush.msra.mxu0 %v327
    %692 = vmatpush.msra.mxu0 %v323
    %693 = vmatpush.msra.mxu0 %v319
    %694 = vmatpush.msra.mxu0 %v315
    %695 = vmatpush.msra.mxu0 %v311
    %696 = vmatpush.msra.mxu0 %v307
    %697 = vmatpush.msra.mxu0 %v303
    %698 = vmatpush.msra.mxu0 %v299
    %699 = vmatmul.f32.gmra.mxu0 %v673
    %v700 = vpop.f32.mrf.mxu0
    %v701 = vadd.f32 0.0, %v700
    %702 = vdwg.mxu0
    %703 = vmatpush.msra.mxu0 %v360
    %704 = vmatpush.msra.mxu0 %v356
    %705 = vmatpush.msra.mxu0 %v352
    %706 = vmatpush.msra.mxu0 %v348
    %707 = vmatpush.msra.mxu0 %v344
    %708 = vmatpush.msra.mxu0 %v340
    %709 = vmatpush.msra.mxu0 %v336
    %710 = vmatpush.msra.mxu0 %v332
    %711 = vmatpush.msra.mxu0 %v328
    %712 = vmatpush.msra.mxu0 %v324
    %713 = vmatpush.msra.mxu0 %v320
    %714 = vmatpush.msra.mxu0 %v316
    %715 = vmatpush.msra.mxu0 %v312
    %716 = vmatpush.msra.mxu0 %v308
    %717 = vmatpush.msra.mxu0 %v304
    %718 = vmatpush.msra.mxu0 %v300
    %719 = vmatmul.f32.gmra.mxu0 %v673
    %v720 = vpop.f32.mrf.mxu0
    %v721 = vadd.f32 0.0, %v720
    %722 = vdwg.mxu0
    %723 = vmatpush.msra.mxu0 %v361
    %724 = vmatpush.msra.mxu0 %v357
    %725 = vmatpush.msra.mxu0 %v353
    %726 = vmatpush.msra.mxu0 %v349
    %727 = vmatpush.msra.mxu0 %v345
    %728 = vmatpush.msra.mxu0 %v341
    %729 = vmatpush.msra.mxu0 %v337
    %730 = vmatpush.msra.mxu0 %v333
    %731 = vmatpush.msra.mxu0 %v329
    %732 = vmatpush.msra.mxu0 %v325
    %733 = vmatpush.msra.mxu0 %v321
    %734 = vmatpush.msra.mxu0 %v317
    %735 = vmatpush.msra.mxu0 %v313
    %736 = vmatpush.msra.mxu0 %v309
    %737 = vmatpush.msra.mxu0 %v305
    %738 = vmatpush.msra.mxu0 %v301
    %739 = vmatmul.f32.gmra.mxu0 %v673
    %v740 = vpop.f32.mrf.mxu0
    %v741 = vadd.f32 0.0, %v740
    %742 = vdwg.mxu0
    %743 = vmatpush.msra.mxu0 %v362
    %744 = vmatpush.msra.mxu0 %v358
    %745 = vmatpush.msra.mxu0 %v354
    %746 = vmatpush.msra.mxu0 %v350
    %747 = vmatpush.msra.mxu0 %v346
    %748 = vmatpush.msra.mxu0 %v342
    %749 = vmatpush.msra.mxu0 %v338
    %750 = vmatpush.msra.mxu0 %v334
    %751 = vmatpush.msra.mxu0 %v330
    %752 = vmatpush.msra.mxu0 %v326
    %753 = vmatpush.msra.mxu0 %v322
    %754 = vmatpush.msra.mxu0 %v318
    %755 = vmatpush.msra.mxu0 %v314
    %756 = vmatpush.msra.mxu0 %v310
    %757 = vmatpush.msra.mxu0 %v306
    %758 = vmatpush.msra.mxu0 %v302
    %759 = vmatmul.f32.gmra.mxu0 %v673
    %v760 = vpop.f32.mrf.mxu0
    %v761 = vadd.f32 0.0, %v760
    %762 = vdwg.mxu0
    %v763 = vadd.f32 %v679, %v701
    %v764 = vadd.f32 %v680, %v721
    %v765 = vadd.f32 %v681, %v741
    %v766 = vadd.f32 %v682, %v761
    %v767 = vxor.u32 %v763, 2147483648
    %v768 = vmul.f32 %v767, 1.442695
    %v769 = vpow.pop %v768
    %v770 = vadd.f32 %v769, 1.0
    %v771 = vrcp.pop %v770
    %v772 = vmul.f32 %v770, %v771
    %v773 = vsub.f32 1.0, %v772
    %v774 = vmul.f32 %v771, %v773
    %v775 = vadd.f32 %v771, %v774
    %vm776 = vweird.f32 %v770
    %vm777 = vweird.f32 %v771
    %vm778 = vmor %vm776, %vm777
    %v779 = vsel %vm778, %v771, %v775
    %v780 = vand.u32 2147483647, %v770
    %vm781 = vcmp.eq.f32.partialorder %v780, 8.507059e+37
    %v782 = vand.u32 %v770, 2147483648
    %v783 = vor.u32 1.1754944e-38, %v782
    %v784 = vsel %vm781, %v783, %v779
    %v785 = vmul.f32 1.0, %v784
    %v786 = vxor.u32 %v764, 2147483648
    %v787 = vmul.f32 %v786, 1.442695
    %v788 = vpow.pop %v787
    %v789 = vadd.f32 %v788, 1.0
    %v790 = vrcp.pop %v789
    %v791 = vmul.f32 %v789, %v790
    %v792 = vsub.f32 1.0, %v791
    %v793 = vmul.f32 %v790, %v792
    %v794 = vadd.f32 %v790, %v793
    %vm795 = vweird.f32 %v789
    %vm796 = vweird.f32 %v790
    %vm797 = vmor %vm795, %vm796
    %v798 = vsel %vm797, %v790, %v794
    %v799 = vand.u32 2147483647, %v789
    %vm800 = vcmp.eq.f32.partialorder %v799, 8.507059e+37
    %v801 = vand.u32 %v789, 2147483648
    %v802 = vor.u32 1.1754944e-38, %v801
    %v803 = vsel %vm800, %v802, %v798
    %v804 = vmul.f32 1.0, %v803
    %v805 = vtanh.pop %v765
    %v806 = vxor.u32 %v766, 2147483648
    %v807 = vmul.f32 %v806, 1.442695
    %v808 = vpow.pop %v807
    %v809 = vadd.f32 %v808, 1.0
    %v810 = vrcp.pop %v809
    %v811 = vmul.f32 %v809, %v810
    %v812 = vsub.f32 1.0, %v811
    %v813 = vmul.f32 %v810, %v812
    %v814 = vadd.f32 %v810, %v813
    %vm815 = vweird.f32 %v809
    %vm816 = vweird.f32 %v810
    %vm817 = vmor %vm815, %vm816
    %v818 = vsel %vm817, %v810, %v814
    %v819 = vand.u32 2147483647, %v809
    %vm820 = vcmp.eq.f32.partialorder %v819, 8.507059e+37
    %v821 = vand.u32 %v809, 2147483648
    %v822 = vor.u32 1.1754944e-38, %v821
    %v823 = vsel %vm820, %v822, %v818
    %v824 = vmul.f32 1.0, %v823
    %v825 = vmul.f32 %v804, %v671
    %v826 = vmul.f32 %v785, %v805
    %v827 = vadd.f32 %v825, %v826
    %v828 = vtanh.pop %v827
    %v829 = vmul.f32 %v824, %v828
    %s830 = scalar_lea.vmem [#allocation8], 16
    %831 = vst [vmem:[%s830] sm:$0xff] %v829
    %s832 = smul.u32 3, 4
    %s833 = smul.addr %s832, 8
    %s834 = scalar_lea.vmem [#allocation2], %s833
    %v835 = vld [vmem:[%s834] sm:$0xff]
    %v836 = vld [vmem:[%s834 + $0x8] sm:$0xff]
    %v837 = vld [vmem:[%s834 + $0x10] sm:$0xff]
    %v838 = vld [vmem:[%s834 + $0x18] sm:$0xff]
    %839 = vmatpush.msra.mxu0 %v359
    %840 = vmatpush.msra.mxu0 %v355
    %841 = vmatpush.msra.mxu0 %v351
    %842 = vmatpush.msra.mxu0 %v347
    %843 = vmatpush.msra.mxu0 %v343
    %844 = vmatpush.msra.mxu0 %v339
    %845 = vmatpush.msra.mxu0 %v335
    %846 = vmatpush.msra.mxu0 %v331
    %847 = vmatpush.msra.mxu0 %v327
    %848 = vmatpush.msra.mxu0 %v323
    %849 = vmatpush.msra.mxu0 %v319
    %850 = vmatpush.msra.mxu0 %v315
    %851 = vmatpush.msra.mxu0 %v311
    %852 = vmatpush.msra.mxu0 %v307
    %853 = vmatpush.msra.mxu0 %v303
    %854 = vmatpush.msra.mxu0 %v299
    %855 = vmatmul.f32.gmra.mxu0 %v829
    %v856 = vpop.f32.mrf.mxu0
    %v857 = vadd.f32 0.0, %v856
    %858 = vdwg.mxu0
    %859 = vmatpush.msra.mxu0 %v360
    %860 = vmatpush.msra.mxu0 %v356
    %861 = vmatpush.msra.mxu0 %v352
    %862 = vmatpush.msra.mxu0 %v348
    %863 = vmatpush.msra.mxu0 %v344
    %864 = vmatpush.msra.mxu0 %v340
    %865 = vmatpush.msra.mxu0 %v336
    %866 = vmatpush.msra.mxu0 %v332
    %867 = vmatpush.msra.mxu0 %v328
    %868 = vmatpush.msra.mxu0 %v324
    %869 = vmatpush.msra.mxu0 %v320
    %870 = vmatpush.msra.mxu0 %v316
    %871 = vmatpush.msra.mxu0 %v312
    %872 = vmatpush.msra.mxu0 %v308
    %873 = vmatpush.msra.mxu0 %v304
    %874 = vmatpush.msra.mxu0 %v300
    %875 = vmatmul.f32.gmra.mxu0 %v829
    %v876 = vpop.f32.mrf.mxu0
    %v877 = vadd.f32 0.0, %v876
    %878 = vdwg.mxu0
    %879 = vmatpush.msra.mxu0 %v361
    %880 = vmatpush.msra.mxu0 %v357
    %881 = vmatpush.msra.mxu0 %v353
    %882 = vmatpush.msra.mxu0 %v349
    %883 = vmatpush.msra.mxu0 %v345
    %884 = vmatpush.msra.mxu0 %v341
    %885 = vmatpush.msra.mxu0 %v337
    %886 = vmatpush.msra.mxu0 %v333
    %887 = vmatpush.msra.mxu0 %v329
    %888 = vmatpush.msra.mxu0 %v325
    %889 = vmatpush.msra.mxu0 %v321
    %890 = vmatpush.msra.mxu0 %v317
    %891 = vmatpush.msra.mxu0 %v313
    %892 = vmatpush.msra.mxu0 %v309
    %893 = vmatpush.msra.mxu0 %v305
    %894 = vmatpush.msra.mxu0 %v301
    %895 = vmatmul.f32.gmra.mxu0 %v829
    %v896 = vpop.f32.mrf.mxu0
    %v897 = vadd.f32 0.0, %v896
    %898 = vdwg.mxu0
    %899 = vmatpush.msra.mxu0 %v362
    %900 = vmatpush.msra.mxu0 %v358
    %901 = vmatpush.msra.mxu0 %v354
    %902 = vmatpush.msra.mxu0 %v350
    %903 = vmatpush.msra.mxu0 %v346
    %904 = vmatpush.msra.mxu0 %v342
    %905 = vmatpush.msra.mxu0 %v338
    %906 = vmatpush.msra.mxu0 %v334
    %907 = vmatpush.msra.mxu0 %v330
    %908 = vmatpush.msra.mxu0 %v326
    %909 = vmatpush.msra.mxu0 %v322
    %910 = vmatpush.msra.mxu0 %v318
    %911 = vmatpush.msra.mxu0 %v314
    %912 = vmatpush.msra.mxu0 %v310
    %913 = vmatpush.msra.mxu0 %v306
    %914 = vmatpush.msra.mxu0 %v302
    %915 = vmatmul.f32.gmra.mxu0 %v829
    %v916 = vpop.f32.mrf.mxu0
    %v917 = vadd.f32 0.0, %v916
    %918 = vdwg.mxu0
    %v919 = vadd.f32 %v835, %v857
    %v920 = vadd.f32 %v836, %v877
    %v921 = vadd.f32 %v837, %v897
    %v922 = vadd.f32 %v838, %v917
    %v923 = vxor.u32 %v919, 2147483648
    %v924 = vmul.f32 %v923, 1.442695
    %v925 = vpow.pop %v924
    %v926 = vadd.f32 %v925, 1.0
    %v927 = vrcp.pop %v926
    %v928 = vmul.f32 %v926, %v927
    %v929 = vsub.f32 1.0, %v928
    %v930 = vmul.f32 %v927, %v929
    %v931 = vadd.f32 %v927, %v930
    %vm932 = vweird.f32 %v926
    %vm933 = vweird.f32 %v927
    %vm934 = vmor %vm932, %vm933
    %v935 = vsel %vm934, %v927, %v931
    %v936 = vand.u32 2147483647, %v926
    %vm937 = vcmp.eq.f32.partialorder %v936, 8.507059e+37
    %v938 = vand.u32 %v926, 2147483648
    %v939 = vor.u32 1.1754944e-38, %v938
    %v940 = vsel %vm937, %v939, %v935
    %v941 = vmul.f32 1.0, %v940
    %v942 = vxor.u32 %v920, 2147483648
    %v943 = vmul.f32 %v942, 1.442695
    %v944 = vpow.pop %v943
    %v945 = vadd.f32 %v944, 1.0
    %v946 = vrcp.pop %v945
    %v947 = vmul.f32 %v945, %v946
    %v948 = vsub.f32 1.0, %v947
    %v949 = vmul.f32 %v946, %v948
    %v950 = vadd.f32 %v946, %v949
    %vm951 = vweird.f32 %v945
    %vm952 = vweird.f32 %v946
    %vm953 = vmor %vm951, %vm952
    %v954 = vsel %vm953, %v946, %v950
    %v955 = vand.u32 2147483647, %v945
    %vm956 = vcmp.eq.f32.partialorder %v955, 8.507059e+37
    %v957 = vand.u32 %v945, 2147483648
    %v958 = vor.u32 1.1754944e-38, %v957
    %v959 = vsel %vm956, %v958, %v954
    %v960 = vmul.f32 1.0, %v959
    %v961 = vtanh.pop %v921
    %v962 = vxor.u32 %v922, 2147483648
    %v963 = vmul.f32 %v962, 1.442695
    %v964 = vpow.pop %v963
    %v965 = vadd.f32 %v964, 1.0
    %v966 = vrcp.pop %v965
    %v967 = vmul.f32 %v965, %v966
    %v968 = vsub.f32 1.0, %v967
    %v969 = vmul.f32 %v966, %v968
    %v970 = vadd.f32 %v966, %v969
    %vm971 = vweird.f32 %v965
    %vm972 = vweird.f32 %v966
    %vm973 = vmor %vm971, %vm972
    %v974 = vsel %vm973, %v966, %v970
    %v975 = vand.u32 2147483647, %v965
    %vm976 = vcmp.eq.f32.partialorder %v975, 8.507059e+37
    %v977 = vand.u32 %v965, 2147483648
    %v978 = vor.u32 1.1754944e-38, %v977
    %v979 = vsel %vm976, %v978, %v974
    %v980 = vmul.f32 1.0, %v979
    %v981 = vmul.f32 %v960, %v827
    %v982 = vmul.f32 %v941, %v961
    %v983 = vadd.f32 %v981, %v982
    %v984 = vtanh.pop %v983
    %v985 = vmul.f32 %v980, %v984
    %s986 = scalar_lea.vmem [#allocation8], 24
    %987 = vst [vmem:[%s986] sm:$0xff] %v985
    %s988 = smul.u32 4, 4
    %s989 = smul.addr %s988, 8
    %s990 = scalar_lea.vmem [#allocation2], %s989
    %v991 = vld [vmem:[%s990] sm:$0xff]
    %v992 = vld [vmem:[%s990 + $0x8] sm:$0xff]
    %v993 = vld [vmem:[%s990 + $0x10] sm:$0xff]
    %v994 = vld [vmem:[%s990 + $0x18] sm:$0xff]
    %995 = vmatpush.msra.mxu0 %v359
    %996 = vmatpush.msra.mxu0 %v355
    %997 = vmatpush.msra.mxu0 %v351
    %998 = vmatpush.msra.mxu0 %v347
    %999 = vmatpush.msra.mxu0 %v343
    %1000 = vmatpush.msra.mxu0 %v339
    %1001 = vmatpush.msra.mxu0 %v335
    %1002 = vmatpush.msra.mxu0 %v331
    %1003 = vmatpush.msra.mxu0 %v327
    %1004 = vmatpush.msra.mxu0 %v323
    %1005 = vmatpush.msra.mxu0 %v319
    %1006 = vmatpush.msra.mxu0 %v315
    %1007 = vmatpush.msra.mxu0 %v311
    %1008 = vmatpush.msra.mxu0 %v307
    %1009 = vmatpush.msra.mxu0 %v303
    %1010 = vmatpush.msra.mxu0 %v299
    %1011 = vmatmul.f32.gmra.mxu0 %v985
    %v1012 = vpop.f32.mrf.mxu0
    %v1013 = vadd.f32 0.0, %v1012
    %1014 = vdwg.mxu0
    %1015 = vmatpush.msra.mxu0 %v360
    %1016 = vmatpush.msra.mxu0 %v356
    %1017 = vmatpush.msra.mxu0 %v352
    %1018 = vmatpush.msra.mxu0 %v348
    %1019 = vmatpush.msra.mxu0 %v344
    %1020 = vmatpush.msra.mxu0 %v340
    %1021 = vmatpush.msra.mxu0 %v336
    %1022 = vmatpush.msra.mxu0 %v332
    %1023 = vmatpush.msra.mxu0 %v328
    %1024 = vmatpush.msra.mxu0 %v324
    %1025 = vmatpush.msra.mxu0 %v320
    %1026 = vmatpush.msra.mxu0 %v316
    %1027 = vmatpush.msra.mxu0 %v312
    %1028 = vmatpush.msra.mxu0 %v308
    %1029 = vmatpush.msra.mxu0 %v304
    %1030 = vmatpush.msra.mxu0 %v300
    %1031 = vmatmul.f32.gmra.mxu0 %v985
    %v1032 = vpop.f32.mrf.mxu0
    %v1033 = vadd.f32 0.0, %v1032
    %1034 = vdwg.mxu0
    %1035 = vmatpush.msra.mxu0 %v361
    %1036 = vmatpush.msra.mxu0 %v357
    %1037 = vmatpush.msra.mxu0 %v353
    %1038 = vmatpush.msra.mxu0 %v349
    %1039 = vmatpush.msra.mxu0 %v345
    %1040 = vmatpush.msra.mxu0 %v341
    %1041 = vmatpush.msra.mxu0 %v337
    %1042 = vmatpush.msra.mxu0 %v333
    %1043 = vmatpush.msra.mxu0 %v329
    %1044 = vmatpush.msra.mxu0 %v325
    %1045 = vmatpush.msra.mxu0 %v321
    %1046 = vmatpush.msra.mxu0 %v317
    %1047 = vmatpush.msra.mxu0 %v313
    %1048 = vmatpush.msra.mxu0 %v309
    %1049 = vmatpush.msra.mxu0 %v305
    %1050 = vmatpush.msra.mxu0 %v301
    %1051 = vmatmul.f32.gmra.mxu0 %v985
    %v1052 = vpop.f32.mrf.mxu0
    %v1053 = vadd.f32 0.0, %v1052
    %1054 = vdwg.mxu0
    %1055 = vmatpush.msra.mxu0 %v362
    %1056 = vmatpush.msra.mxu0 %v358
    %1057 = vmatpush.msra.mxu0 %v354
    %1058 = vmatpush.msra.mxu0 %v350
    %1059 = vmatpush.msra.mxu0 %v346
    %1060 = vmatpush.msra.mxu0 %v342
    %1061 = vmatpush.msra.mxu0 %v338
    %1062 = vmatpush.msra.mxu0 %v334
    %1063 = vmatpush.msra.mxu0 %v330
    %1064 = vmatpush.msra.mxu0 %v326
    %1065 = vmatpush.msra.mxu0 %v322
    %1066 = vmatpush.msra.mxu0 %v318
    %1067 = vmatpush.msra.mxu0 %v314
    %1068 = vmatpush.msra.mxu0 %v310
    %1069 = vmatpush.msra.mxu0 %v306
    %1070 = vmatpush.msra.mxu0 %v302
    %1071 = vmatmul.f32.gmra.mxu0 %v985
    %v1072 = vpop.f32.mrf.mxu0
    %v1073 = vadd.f32 0.0, %v1072
    %1074 = vdwg.mxu0
    %v1075 = vadd.f32 %v991, %v1013
    %v1076 = vadd.f32 %v992, %v1033
    %v1077 = vadd.f32 %v993, %v1053
    %v1078 = vadd.f32 %v994, %v1073
    %v1079 = vxor.u32 %v1075, 2147483648
    %v1080 = vmul.f32 %v1079, 1.442695
    %v1081 = vpow.pop %v1080
    %v1082 = vadd.f32 %v1081, 1.0
    %v1083 = vrcp.pop %v1082
    %v1084 = vmul.f32 %v1082, %v1083
    %v1085 = vsub.f32 1.0, %v1084
    %v1086 = vmul.f32 %v1083, %v1085
    %v1087 = vadd.f32 %v1083, %v1086
    %vm1088 = vweird.f32 %v1082
    %vm1089 = vweird.f32 %v1083
    %vm1090 = vmor %vm1088, %vm1089
    %v1091 = vsel %vm1090, %v1083, %v1087
    %v1092 = vand.u32 2147483647, %v1082
    %vm1093 = vcmp.eq.f32.partialorder %v1092, 8.507059e+37
    %v1094 = vand.u32 %v1082, 2147483648
    %v1095 = vor.u32 1.1754944e-38, %v1094
    %v1096 = vsel %vm1093, %v1095, %v1091
    %v1097 = vmul.f32 1.0, %v1096
    %v1098 = vxor.u32 %v1076, 2147483648
    %v1099 = vmul.f32 %v1098, 1.442695
    %v1100 = vpow.pop %v1099
    %v1101 = vadd.f32 %v1100, 1.0
    %v1102 = vrcp.pop %v1101
    %v1103 = vmul.f32 %v1101, %v1102
    %v1104 = vsub.f32 1.0, %v1103
    %v1105 = vmul.f32 %v1102, %v1104
    %v1106 = vadd.f32 %v1102, %v1105
    %vm1107 = vweird.f32 %v1101
    %vm1108 = vweird.f32 %v1102
    %vm1109 = vmor %vm1107, %vm1108
    %v1110 = vsel %vm1109, %v1102, %v1106
    %v1111 = vand.u32 2147483647, %v1101
    %vm1112 = vcmp.eq.f32.partialorder %v1111, 8.507059e+37
    %v1113 = vand.u32 %v1101, 2147483648
    %v1114 = vor.u32 1.1754944e-38, %v1113
    %v1115 = vsel %vm1112, %v1114, %v1110
    %v1116 = vmul.f32 1.0, %v1115
    %v1117 = vtanh.pop %v1077
    %v1118 = vxor.u32 %v1078, 2147483648
    %v1119 = vmul.f32 %v1118, 1.442695
    %v1120 = vpow.pop %v1119
    %v1121 = vadd.f32 %v1120, 1.0
    %v1122 = vrcp.pop %v1121
    %v1123 = vmul.f32 %v1121, %v1122
    %v1124 = vsub.f32 1.0, %v1123
    %v1125 = vmul.f32 %v1122, %v1124
    %v1126 = vadd.f32 %v1122, %v1125
    %vm1127 = vweird.f32 %v1121
    %vm1128 = vweird.f32 %v1122
    %vm1129 = vmor %vm1127, %vm1128
    %v1130 = vsel %vm1129, %v1122, %v1126
    %v1131 = vand.u32 2147483647, %v1121
    %vm1132 = vcmp.eq.f32.partialorder %v1131, 8.507059e+37
    %v1133 = vand.u32 %v1121, 2147483648
    %v1134 = vor.u32 1.1754944e-38, %v1133
    %v1135 = vsel %vm1132, %v1134, %v1130
    %v1136 = vmul.f32 1.0, %v1135
    %v1137 = vmul.f32 %v1116, %v983
    %v1138 = vmul.f32 %v1097, %v1117
    %v1139 = vadd.f32 %v1137, %v1138
    %v1140 = vtanh.pop %v1139
    %v1141 = vmul.f32 %v1136, %v1140
    %s1142 = scalar_lea.vmem [#allocation8], 32
    %1143 = vst [vmem:[%s1142] sm:$0xff] %v1141
    %s1144 = smul.u32 5, 4
    %s1145 = smul.addr %s1144, 8
    %s1146 = scalar_lea.vmem [#allocation2], %s1145
    %v1147 = vld [vmem:[%s1146] sm:$0xff]
    %v1148 = vld [vmem:[%s1146 + $0x8] sm:$0xff]
    %v1149 = vld [vmem:[%s1146 + $0x10] sm:$0xff]
    %v1150 = vld [vmem:[%s1146 + $0x18] sm:$0xff]
    %1151 = vmatpush.msra.mxu0 %v359
    %1152 = vmatpush.msra.mxu0 %v355
    %1153 = vmatpush.msra.mxu0 %v351
    %1154 = vmatpush.msra.mxu0 %v347
    %1155 = vmatpush.msra.mxu0 %v343
    %1156 = vmatpush.msra.mxu0 %v339
    %1157 = vmatpush.msra.mxu0 %v335
    %1158 = vmatpush.msra.mxu0 %v331
    %1159 = vmatpush.msra.mxu0 %v327
    %1160 = vmatpush.msra.mxu0 %v323
    %1161 = vmatpush.msra.mxu0 %v319
    %1162 = vmatpush.msra.mxu0 %v315
    %1163 = vmatpush.msra.mxu0 %v311
    %1164 = vmatpush.msra.mxu0 %v307
    %1165 = vmatpush.msra.mxu0 %v303
    %1166 = vmatpush.msra.mxu0 %v299
    %1167 = vmatmul.f32.gmra.mxu0 %v1141
    %v1168 = vpop.f32.mrf.mxu0
    %v1169 = vadd.f32 0.0, %v1168
    %1170 = vdwg.mxu0
    %1171 = vmatpush.msra.mxu0 %v360
    %1172 = vmatpush.msra.mxu0 %v356
    %1173 = vmatpush.msra.mxu0 %v352
    %1174 = vmatpush.msra.mxu0 %v348
    %1175 = vmatpush.msra.mxu0 %v344
    %1176 = vmatpush.msra.mxu0 %v340
    %1177 = vmatpush.msra.mxu0 %v336
    %1178 = vmatpush.msra.mxu0 %v332
    %1179 = vmatpush.msra.mxu0 %v328
    %1180 = vmatpush.msra.mxu0 %v324
    %1181 = vmatpush.msra.mxu0 %v320
    %1182 = vmatpush.msra.mxu0 %v316
    %1183 = vmatpush.msra.mxu0 %v312
    %1184 = vmatpush.msra.mxu0 %v308
    %1185 = vmatpush.msra.mxu0 %v304
    %1186 = vmatpush.msra.mxu0 %v300
    %1187 = vmatmul.f32.gmra.mxu0 %v1141
    %v1188 = vpop.f32.mrf.mxu0
    %v1189 = vadd.f32 0.0, %v1188
    %1190 = vdwg.mxu0
    %1191 = vmatpush.msra.mxu0 %v361
    %1192 = vmatpush.msra.mxu0 %v357
    %1193 = vmatpush.msra.mxu0 %v353
    %1194 = vmatpush.msra.mxu0 %v349
    %1195 = vmatpush.msra.mxu0 %v345
    %1196 = vmatpush.msra.mxu0 %v341
    %1197 = vmatpush.msra.mxu0 %v337
    %1198 = vmatpush.msra.mxu0 %v333
    %1199 = vmatpush.msra.mxu0 %v329
    %1200 = vmatpush.msra.mxu0 %v325
    %1201 = vmatpush.msra.mxu0 %v321
    %1202 = vmatpush.msra.mxu0 %v317
    %1203 = vmatpush.msra.mxu0 %v313
    %1204 = vmatpush.msra.mxu0 %v309
    %1205 = vmatpush.msra.mxu0 %v305
    %1206 = vmatpush.msra.mxu0 %v301
    %1207 = vmatmul.f32.gmra.mxu0 %v1141
    %v1208 = vpop.f32.mrf.mxu0
    %v1209 = vadd.f32 0.0, %v1208
    %1210 = vdwg.mxu0
    %1211 = vmatpush.msra.mxu0 %v362
    %1212 = vmatpush.msra.mxu0 %v358
    %1213 = vmatpush.msra.mxu0 %v354
    %1214 = vmatpush.msra.mxu0 %v350
    %1215 = vmatpush.msra.mxu0 %v346
    %1216 = vmatpush.msra.mxu0 %v342
    %1217 = vmatpush.msra.mxu0 %v338
    %1218 = vmatpush.msra.mxu0 %v334
    %1219 = vmatpush.msra.mxu0 %v330
    %1220 = vmatpush.msra.mxu0 %v326
    %1221 = vmatpush.msra.mxu0 %v322
    %1222 = vmatpush.msra.mxu0 %v318
    %1223 = vmatpush.msra.mxu0 %v314
    %1224 = vmatpush.msra.mxu0 %v310
    %1225 = vmatpush.msra.mxu0 %v306
    %1226 = vmatpush.msra.mxu0 %v302
    %1227 = vmatmul.f32.gmra.mxu0 %v1141
    %v1228 = vpop.f32.mrf.mxu0
    %v1229 = vadd.f32 0.0, %v1228
    %1230 = vdwg.mxu0
    %v1231 = vadd.f32 %v1147, %v1169
    %v1232 = vadd.f32 %v1148, %v1189
    %v1233 = vadd.f32 %v1149, %v1209
    %v1234 = vadd.f32 %v1150, %v1229
    %v1235 = vxor.u32 %v1231, 2147483648
    %v1236 = vmul.f32 %v1235, 1.442695
    %v1237 = vpow.pop %v1236
    %v1238 = vadd.f32 %v1237, 1.0
    %v1239 = vrcp.pop %v1238
    %v1240 = vmul.f32 %v1238, %v1239
    %v1241 = vsub.f32 1.0, %v1240
    %v1242 = vmul.f32 %v1239, %v1241
    %v1243 = vadd.f32 %v1239, %v1242
    %vm1244 = vweird.f32 %v1238
    %vm1245 = vweird.f32 %v1239
    %vm1246 = vmor %vm1244, %vm1245
    %v1247 = vsel %vm1246, %v1239, %v1243
    %v1248 = vand.u32 2147483647, %v1238
    %vm1249 = vcmp.eq.f32.partialorder %v1248, 8.507059e+37
    %v1250 = vand.u32 %v1238, 2147483648
    %v1251 = vor.u32 1.1754944e-38, %v1250
    %v1252 = vsel %vm1249, %v1251, %v1247
    %v1253 = vmul.f32 1.0, %v1252
    %v1254 = vxor.u32 %v1232, 2147483648
    %v1255 = vmul.f32 %v1254, 1.442695
    %v1256 = vpow.pop %v1255
    %v1257 = vadd.f32 %v1256, 1.0
    %v1258 = vrcp.pop %v1257
    %v1259 = vmul.f32 %v1257, %v1258
    %v1260 = vsub.f32 1.0, %v1259
    %v1261 = vmul.f32 %v1258, %v1260
    %v1262 = vadd.f32 %v1258, %v1261
    %vm1263 = vweird.f32 %v1257
    %vm1264 = vweird.f32 %v1258
    %vm1265 = vmor %vm1263, %vm1264
    %v1266 = vsel %vm1265, %v1258, %v1262
    %v1267 = vand.u32 2147483647, %v1257
    %vm1268 = vcmp.eq.f32.partialorder %v1267, 8.507059e+37
    %v1269 = vand.u32 %v1257, 2147483648
    %v1270 = vor.u32 1.1754944e-38, %v1269
    %v1271 = vsel %vm1268, %v1270, %v1266
    %v1272 = vmul.f32 1.0, %v1271
    %v1273 = vtanh.pop %v1233
    %v1274 = vxor.u32 %v1234, 2147483648
    %v1275 = vmul.f32 %v1274, 1.442695
    %v1276 = vpow.pop %v1275
    %v1277 = vadd.f32 %v1276, 1.0
    %v1278 = vrcp.pop %v1277
    %v1279 = vmul.f32 %v1277, %v1278
    %v1280 = vsub.f32 1.0, %v1279
    %v1281 = vmul.f32 %v1278, %v1280
    %v1282 = vadd.f32 %v1278, %v1281
    %vm1283 = vweird.f32 %v1277
    %vm1284 = vweird.f32 %v1278
    %vm1285 = vmor %vm1283, %vm1284
    %v1286 = vsel %vm1285, %v1278, %v1282
    %v1287 = vand.u32 2147483647, %v1277
    %vm1288 = vcmp.eq.f32.partialorder %v1287, 8.507059e+37
    %v1289 = vand.u32 %v1277, 2147483648
    %v1290 = vor.u32 1.1754944e-38, %v1289
    %v1291 = vsel %vm1288, %v1290, %v1286
    %v1292 = vmul.f32 1.0, %v1291
    %v1293 = vmul.f32 %v1272, %v1139
    %v1294 = vmul.f32 %v1253, %v1273
    %v1295 = vadd.f32 %v1293, %v1294
    %v1296 = vtanh.pop %v1295
    %v1297 = vmul.f32 %v1292, %v1296
    %s1298 = scalar_lea.vmem [#allocation8], 40
    %1299 = vst [vmem:[%s1298] sm:$0xff] %v1297
    %s1300 = smul.u32 6, 4
    %s1301 = smul.addr %s1300, 8
    %s1302 = scalar_lea.vmem [#allocation2], %s1301
    %v1303 = vld [vmem:[%s1302] sm:$0xff]
    %v1304 = vld [vmem:[%s1302 + $0x8] sm:$0xff]
    %v1305 = vld [vmem:[%s1302 + $0x10] sm:$0xff]
    %v1306 = vld [vmem:[%s1302 + $0x18] sm:$0xff]
    %1307 = vmatpush.msra.mxu0 %v359
    %1308 = vmatpush.msra.mxu0 %v355
    %1309 = vmatpush.msra.mxu0 %v351
    %1310 = vmatpush.msra.mxu0 %v347
    %1311 = vmatpush.msra.mxu0 %v343
    %1312 = vmatpush.msra.mxu0 %v339
    %1313 = vmatpush.msra.mxu0 %v335
    %1314 = vmatpush.msra.mxu0 %v331
    %1315 = vmatpush.msra.mxu0 %v327
    %1316 = vmatpush.msra.mxu0 %v323
    %1317 = vmatpush.msra.mxu0 %v319
    %1318 = vmatpush.msra.mxu0 %v315
    %1319 = vmatpush.msra.mxu0 %v311
    %1320 = vmatpush.msra.mxu0 %v307
    %1321 = vmatpush.msra.mxu0 %v303
    %1322 = vmatpush.msra.mxu0 %v299
    %1323 = vmatmul.f32.gmra.mxu0 %v1297
    %v1324 = vpop.f32.mrf.mxu0
    %v1325 = vadd.f32 0.0, %v1324
    %1326 = vdwg.mxu0
    %1327 = vmatpush.msra.mxu0 %v360
    %1328 = vmatpush.msra.mxu0 %v356
    %1329 = vmatpush.msra.mxu0 %v352
    %1330 = vmatpush.msra.mxu0 %v348
    %1331 = vmatpush.msra.mxu0 %v344
    %1332 = vmatpush.msra.mxu0 %v340
    %1333 = vmatpush.msra.mxu0 %v336
    %1334 = vmatpush.msra.mxu0 %v332
    %1335 = vmatpush.msra.mxu0 %v328
    %1336 = vmatpush.msra.mxu0 %v324
    %1337 = vmatpush.msra.mxu0 %v320
    %1338 = vmatpush.msra.mxu0 %v316
    %1339 = vmatpush.msra.mxu0 %v312
    %1340 = vmatpush.msra.mxu0 %v308
    %1341 = vmatpush.msra.mxu0 %v304
    %1342 = vmatpush.msra.mxu0 %v300
    %1343 = vmatmul.f32.gmra.mxu0 %v1297
    %v1344 = vpop.f32.mrf.mxu0
    %v1345 = vadd.f32 0.0, %v1344
    %1346 = vdwg.mxu0
    %1347 = vmatpush.msra.mxu0 %v361
    %1348 = vmatpush.msra.mxu0 %v357
    %1349 = vmatpush.msra.mxu0 %v353
    %1350 = vmatpush.msra.mxu0 %v349
    %1351 = vmatpush.msra.mxu0 %v345
    %1352 = vmatpush.msra.mxu0 %v341
    %1353 = vmatpush.msra.mxu0 %v337
    %1354 = vmatpush.msra.mxu0 %v333
    %1355 = vmatpush.msra.mxu0 %v329
    %1356 = vmatpush.msra.mxu0 %v325
    %1357 = vmatpush.msra.mxu0 %v321
    %1358 = vmatpush.msra.mxu0 %v317
    %1359 = vmatpush.msra.mxu0 %v313
    %1360 = vmatpush.msra.mxu0 %v309
    %1361 = vmatpush.msra.mxu0 %v305
    %1362 = vmatpush.msra.mxu0 %v301
    %1363 = vmatmul.f32.gmra.mxu0 %v1297
    %v1364 = vpop.f32.mrf.mxu0
    %v1365 = vadd.f32 0.0, %v1364
    %1366 = vdwg.mxu0
    %1367 = vmatpush.msra.mxu0 %v362
    %1368 = vmatpush.msra.mxu0 %v358
    %1369 = vmatpush.msra.mxu0 %v354
    %1370 = vmatpush.msra.mxu0 %v350
    %1371 = vmatpush.msra.mxu0 %v346
    %1372 = vmatpush.msra.mxu0 %v342
    %1373 = vmatpush.msra.mxu0 %v338
    %1374 = vmatpush.msra.mxu0 %v334
    %1375 = vmatpush.msra.mxu0 %v330
    %1376 = vmatpush.msra.mxu0 %v326
    %1377 = vmatpush.msra.mxu0 %v322
    %1378 = vmatpush.msra.mxu0 %v318
    %1379 = vmatpush.msra.mxu0 %v314
    %1380 = vmatpush.msra.mxu0 %v310
    %1381 = vmatpush.msra.mxu0 %v306
    %1382 = vmatpush.msra.mxu0 %v302
    %1383 = vmatmul.f32.gmra.mxu0 %v1297
    %v1384 = vpop.f32.mrf.mxu0
    %v1385 = vadd.f32 0.0, %v1384
    %1386 = vdwg.mxu0
    %v1387 = vadd.f32 %v1303, %v1325
    %v1388 = vadd.f32 %v1304, %v1345
    %v1389 = vadd.f32 %v1305, %v1365
    %v1390 = vadd.f32 %v1306, %v1385
    %v1391 = vxor.u32 %v1387, 2147483648
    %v1392 = vmul.f32 %v1391, 1.442695
    %v1393 = vpow.pop %v1392
    %v1394 = vadd.f32 %v1393, 1.0
    %v1395 = vrcp.pop %v1394
    %v1396 = vmul.f32 %v1394, %v1395
    %v1397 = vsub.f32 1.0, %v1396
    %v1398 = vmul.f32 %v1395, %v1397
    %v1399 = vadd.f32 %v1395, %v1398
    %vm1400 = vweird.f32 %v1394
    %vm1401 = vweird.f32 %v1395
    %vm1402 = vmor %vm1400, %vm1401
    %v1403 = vsel %vm1402, %v1395, %v1399
    %v1404 = vand.u32 2147483647, %v1394
    %vm1405 = vcmp.eq.f32.partialorder %v1404, 8.507059e+37
    %v1406 = vand.u32 %v1394, 2147483648
    %v1407 = vor.u32 1.1754944e-38, %v1406
    %v1408 = vsel %vm1405, %v1407, %v1403
    %v1409 = vmul.f32 1.0, %v1408
    %v1410 = vxor.u32 %v1388, 2147483648
    %v1411 = vmul.f32 %v1410, 1.442695
    %v1412 = vpow.pop %v1411
    %v1413 = vadd.f32 %v1412, 1.0
    %v1414 = vrcp.pop %v1413
    %v1415 = vmul.f32 %v1413, %v1414
    %v1416 = vsub.f32 1.0, %v1415
    %v1417 = vmul.f32 %v1414, %v1416
    %v1418 = vadd.f32 %v1414, %v1417
    %vm1419 = vweird.f32 %v1413
    %vm1420 = vweird.f32 %v1414
    %vm1421 = vmor %vm1419, %vm1420
    %v1422 = vsel %vm1421, %v1414, %v1418
    %v1423 = vand.u32 2147483647, %v1413
    %vm1424 = vcmp.eq.f32.partialorder %v1423, 8.507059e+37
    %v1425 = vand.u32 %v1413, 2147483648
    %v1426 = vor.u32 1.1754944e-38, %v1425
    %v1427 = vsel %vm1424, %v1426, %v1422
    %v1428 = vmul.f32 1.0, %v1427
    %v1429 = vtanh.pop %v1389
    %v1430 = vxor.u32 %v1390, 2147483648
    %v1431 = vmul.f32 %v1430, 1.442695
    %v1432 = vpow.pop %v1431
    %v1433 = vadd.f32 %v1432, 1.0
    %v1434 = vrcp.pop %v1433
    %v1435 = vmul.f32 %v1433, %v1434
    %v1436 = vsub.f32 1.0, %v1435
    %v1437 = vmul.f32 %v1434, %v1436
    %v1438 = vadd.f32 %v1434, %v1437
    %vm1439 = vweird.f32 %v1433
    %vm1440 = vweird.f32 %v1434
    %vm1441 = vmor %vm1439, %vm1440
    %v1442 = vsel %vm1441, %v1434, %v1438
    %v1443 = vand.u32 2147483647, %v1433
    %vm1444 = vcmp.eq.f32.partialorder %v1443, 8.507059e+37
    %v1445 = vand.u32 %v1433, 2147483648
    %v1446 = vor.u32 1.1754944e-38, %v1445
    %v1447 = vsel %vm1444, %v1446, %v1442
    %v1448 = vmul.f32 1.0, %v1447
    %v1449 = vmul.f32 %v1428, %v1295
    %v1450 = vmul.f32 %v1409, %v1429
    %v1451 = vadd.f32 %v1449, %v1450
    %v1452 = vtanh.pop %v1451
    %v1453 = vmul.f32 %v1448, %v1452
    %s1454 = scalar_lea.vmem [#allocation8], 48
    %1455 = vst [vmem:[%s1454] sm:$0xff] %v1453
    %s1456 = smul.u32 7, 4
    %s1457 = smul.addr %s1456, 8
    %s1458 = scalar_lea.vmem [#allocation2], %s1457
    %v1459 = vld [vmem:[%s1458] sm:$0xff]
    %v1460 = vld [vmem:[%s1458 + $0x8] sm:$0xff]
    %v1461 = vld [vmem:[%s1458 + $0x10] sm:$0xff]
    %v1462 = vld [vmem:[%s1458 + $0x18] sm:$0xff]
    %1463 = vmatpush.msra.mxu0 %v359
    %1464 = vmatpush.msra.mxu0 %v355
    %1465 = vmatpush.msra.mxu0 %v351
    %1466 = vmatpush.msra.mxu0 %v347
    %1467 = vmatpush.msra.mxu0 %v343
    %1468 = vmatpush.msra.mxu0 %v339
    %1469 = vmatpush.msra.mxu0 %v335
    %1470 = vmatpush.msra.mxu0 %v331
    %1471 = vmatpush.msra.mxu0 %v327
    %1472 = vmatpush.msra.mxu0 %v323
    %1473 = vmatpush.msra.mxu0 %v319
    %1474 = vmatpush.msra.mxu0 %v315
    %1475 = vmatpush.msra.mxu0 %v311
    %1476 = vmatpush.msra.mxu0 %v307
    %1477 = vmatpush.msra.mxu0 %v303
    %1478 = vmatpush.msra.mxu0 %v299
    %1479 = vmatmul.f32.gmra.mxu0 %v1453
    %v1480 = vpop.f32.mrf.mxu0
    %v1481 = vadd.f32 0.0, %v1480
    %1482 = vdwg.mxu0
    %1483 = vmatpush.msra.mxu0 %v360
    %1484 = vmatpush.msra.mxu0 %v356
    %1485 = vmatpush.msra.mxu0 %v352
    %1486 = vmatpush.msra.mxu0 %v348
    %1487 = vmatpush.msra.mxu0 %v344
    %1488 = vmatpush.msra.mxu0 %v340
    %1489 = vmatpush.msra.mxu0 %v336
    %1490 = vmatpush.msra.mxu0 %v332
    %1491 = vmatpush.msra.mxu0 %v328
    %1492 = vmatpush.msra.mxu0 %v324
    %1493 = vmatpush.msra.mxu0 %v320
    %1494 = vmatpush.msra.mxu0 %v316
    %1495 = vmatpush.msra.mxu0 %v312
    %1496 = vmatpush.msra.mxu0 %v308
    %1497 = vmatpush.msra.mxu0 %v304
    %1498 = vmatpush.msra.mxu0 %v300
    %1499 = vmatmul.f32.gmra.mxu0 %v1453
    %v1500 = vpop.f32.mrf.mxu0
    %v1501 = vadd.f32 0.0, %v1500
    %1502 = vdwg.mxu0
    %1503 = vmatpush.msra.mxu0 %v361
    %1504 = vmatpush.msra.mxu0 %v357
    %1505 = vmatpush.msra.mxu0 %v353
    %1506 = vmatpush.msra.mxu0 %v349
    %1507 = vmatpush.msra.mxu0 %v345
    %1508 = vmatpush.msra.mxu0 %v341
    %1509 = vmatpush.msra.mxu0 %v337
    %1510 = vmatpush.msra.mxu0 %v333
    %1511 = vmatpush.msra.mxu0 %v329
    %1512 = vmatpush.msra.mxu0 %v325
    %1513 = vmatpush.msra.mxu0 %v321
    %1514 = vmatpush.msra.mxu0 %v317
    %1515 = vmatpush.msra.mxu0 %v313
    %1516 = vmatpush.msra.mxu0 %v309
    %1517 = vmatpush.msra.mxu0 %v305
    %1518 = vmatpush.msra.mxu0 %v301
    %1519 = vmatmul.f32.gmra.mxu0 %v1453
    %v1520 = vpop.f32.mrf.mxu0
    %v1521 = vadd.f32 0.0, %v1520
    %1522 = vdwg.mxu0
    %1523 = vmatpush.msra.mxu0 %v362
    %1524 = vmatpush.msra.mxu0 %v358
    %1525 = vmatpush.msra.mxu0 %v354
    %1526 = vmatpush.msra.mxu0 %v350
    %1527 = vmatpush.msra.mxu0 %v346
    %1528 = vmatpush.msra.mxu0 %v342
    %1529 = vmatpush.msra.mxu0 %v338
    %1530 = vmatpush.msra.mxu0 %v334
    %1531 = vmatpush.msra.mxu0 %v330
    %1532 = vmatpush.msra.mxu0 %v326
    %1533 = vmatpush.msra.mxu0 %v322
    %1534 = vmatpush.msra.mxu0 %v318
    %1535 = vmatpush.msra.mxu0 %v314
    %1536 = vmatpush.msra.mxu0 %v310
    %1537 = vmatpush.msra.mxu0 %v306
    %1538 = vmatpush.msra.mxu0 %v302
    %1539 = vmatmul.f32.gmra.mxu0 %v1453
    %v1540 = vpop.f32.mrf.mxu0
    %v1541 = vadd.f32 0.0, %v1540
    %1542 = vdwg.mxu0
    %v1543 = vadd.f32 %v1459, %v1481
    %v1544 = vadd.f32 %v1460, %v1501
    %v1545 = vadd.f32 %v1461, %v1521
    %v1546 = vadd.f32 %v1462, %v1541
    %v1547 = vxor.u32 %v1543, 2147483648
    %v1548 = vmul.f32 %v1547, 1.442695
    %v1549 = vpow.pop %v1548
    %v1550 = vadd.f32 %v1549, 1.0
    %v1551 = vrcp.pop %v1550
    %v1552 = vmul.f32 %v1550, %v1551
    %v1553 = vsub.f32 1.0, %v1552
    %v1554 = vmul.f32 %v1551, %v1553
    %v1555 = vadd.f32 %v1551, %v1554
    %vm1556 = vweird.f32 %v1550
    %vm1557 = vweird.f32 %v1551
    %vm1558 = vmor %vm1556, %vm1557
    %v1559 = vsel %vm1558, %v1551, %v1555
    %v1560 = vand.u32 2147483647, %v1550
    %vm1561 = vcmp.eq.f32.partialorder %v1560, 8.507059e+37
    %v1562 = vand.u32 %v1550, 2147483648
    %v1563 = vor.u32 1.1754944e-38, %v1562
    %v1564 = vsel %vm1561, %v1563, %v1559
    %v1565 = vmul.f32 1.0, %v1564
    %v1566 = vxor.u32 %v1544, 2147483648
    %v1567 = vmul.f32 %v1566, 1.442695
    %v1568 = vpow.pop %v1567
    %v1569 = vadd.f32 %v1568, 1.0
    %v1570 = vrcp.pop %v1569
    %v1571 = vmul.f32 %v1569, %v1570
    %v1572 = vsub.f32 1.0, %v1571
    %v1573 = vmul.f32 %v1570, %v1572
    %v1574 = vadd.f32 %v1570, %v1573
    %vm1575 = vweird.f32 %v1569
    %vm1576 = vweird.f32 %v1570
    %vm1577 = vmor %vm1575, %vm1576
    %v1578 = vsel %vm1577, %v1570, %v1574
    %v1579 = vand.u32 2147483647, %v1569
    %vm1580 = vcmp.eq.f32.partialorder %v1579, 8.507059e+37
    %v1581 = vand.u32 %v1569, 2147483648
    %v1582 = vor.u32 1.1754944e-38, %v1581
    %v1583 = vsel %vm1580, %v1582, %v1578
    %v1584 = vmul.f32 1.0, %v1583
    %v1585 = vtanh.pop %v1545
    %v1586 = vxor.u32 %v1546, 2147483648
    %v1587 = vmul.f32 %v1586, 1.442695
    %v1588 = vpow.pop %v1587
    %v1589 = vadd.f32 %v1588, 1.0
    %v1590 = vrcp.pop %v1589
    %v1591 = vmul.f32 %v1589, %v1590
    %v1592 = vsub.f32 1.0, %v1591
    %v1593 = vmul.f32 %v1590, %v1592
    %v1594 = vadd.f32 %v1590, %v1593
    %vm1595 = vweird.f32 %v1589
    %vm1596 = vweird.f32 %v1590
    %vm1597 = vmor %vm1595, %vm1596
    %v1598 = vsel %vm1597, %v1590, %v1594
    %v1599 = vand.u32 2147483647, %v1589
    %vm1600 = vcmp.eq.f32.partialorder %v1599, 8.507059e+37
    %v1601 = vand.u32 %v1589, 2147483648
    %v1602 = vor.u32 1.1754944e-38, %v1601
    %v1603 = vsel %vm1600, %v1602, %v1598
    %v1604 = vmul.f32 1.0, %v1603
    %v1605 = vmul.f32 %v1584, %v1451
    %v1606 = vmul.f32 %v1565, %v1585
    %v1607 = vadd.f32 %v1605, %v1606
    %v1608 = vtanh.pop %v1607
    %v1609 = vmul.f32 %v1604, %v1608
    %s1610 = scalar_lea.vmem [#allocation8], 56
    %1611 = vst [vmem:[%s1610] sm:$0xff] %v1609
    %1612 = vst [vmem:[#allocation3] sm:$0xff] %v1609
    %1613 = vst [vmem:[#allocation4] sm:$0xff] %v1607
    // Predicated region
    $region26: #{tpu_custom_call.1} parent=1 // pred_check
      _
    $region27: #{tpu_custom_call.1} parent=1 // pred_check_branch
      %1615 = sbr.rel (0) target = $region29
    $region28: #{tpu_custom_call.1} parent=1 // pred_region
      %1617 = vsyncadd [#allocation7], 0
      %s1618 = sshll.u32 [#allocation8], 4
      %s1619 = int_to_ptr.vmem [resolvable:$true] %s1618
      %s1620 = sshll.u32 %s4, 4
      %s1621 = int_to_ptr.hbm [resolvable:$true] %s1620
      %1626 = dma.vmem_to_hbm [thread:$0]  %s1619, 1024, %s1621, [#allocation7], 128, 128, 8
    $region29: #{tpu_custom_call.1} parent=1 // pred_fallthru
      _
    // Predicated region
    $region30: #{tpu_custom_call.1} parent=1 // pred_check
      _
    $region31: #{tpu_custom_call.1} parent=1 // pred_check_branch
      %1628 = sbr.rel (0) target = $region33
    $region32: #{tpu_custom_call.1} parent=1 // pred_region
      %1630 = dma.done [#allocation7], 1024
    $region33: #{tpu_custom_call.1} parent=1 // pred_fallthru
      _
    %1631 = vsyncpa [#allocation6], 1
    %1632 = vsyncpa [#allocation7], 1

</llo_original>
